<compile_context>
chip_gen: v6e
topology: v6e:2x2x1
jax: 0.10.0
libtpu: 0.0.40
codegen_flags: <defaults>
</compile_context>

<pallas_src>
import math

import jax
import jax.numpy as jnp
from jax.experimental import pallas as pl
from jax.experimental.pallas import tpu as pltpu


def _pick_heads_per_group(num_heads, head_dim, lane_target=128):
    """Largest divisor of num_heads with Hb*head_dim <= lane_target (>=1)."""
    hb = max(1, min(num_heads, lane_target // max(head_dim, 1)))
    while num_heads % hb:
        hb -= 1
    return hb


def _pick_q_tile(seq_q, target=256):
    """Query-tile length: divides seq_q, multiple of 8 (or the full length)."""
    if seq_q <= target:
        return seq_q
    for t in range(target, 7, -1):
        if seq_q % t == 0 and t % 8 == 0:
            return t
    return seq_q


def _make_kernel(self_attn, heads_per_group, head_dim):
    Hb, Dh = heads_per_group, head_dim
    G = Hb * Dh
    bf16, f32 = jnp.bfloat16, jnp.float32

    def _attn_and_project(hg, q, k, v, wo_ref, bo_ref, o_ref, acc_ref):
        # q: (Tq, G) f32; k, v: (Skv, G) f32, lanes laid out head-major.
        ctx_parts = []
        for i in range(Hb):                       # static unroll, Hb is small
            sl = slice(i * Dh, (i + 1) * Dh)
            qi = q[:, sl].astype(bf16)
            ki = k[:, sl].astype(bf16)
            vi = v[:, sl].astype(bf16)
            # scores = qi @ ki^T without materializing a transpose.
            s = jax.lax.dot_general(qi, ki, (((1,), (1,)), ((), ())),
                                    preferred_element_type=f32)        # (Tq, Skv)
            # Numerically-stable softmax over keys (f32; reciprocal on the EUP).
            s = s - jnp.max(s, axis=-1, keepdims=True)
            p = jnp.exp(s)
            p = p * pl.reciprocal(jnp.sum(p, axis=-1, keepdims=True), approx=True)
            # TODO(synk): training-mode dropout on p would go here (eval = identity).
            ctx_parts.append(
                jnp.dot(p.astype(bf16), vi, preferred_element_type=f32).astype(bf16))
        ctx = ctx_parts[0] if Hb == 1 else jnp.concatenate(ctx_parts, axis=-1)  # (Tq, G)

        # Fused "concat heads + output linear": dense K = G contraction, result
        # accumulated into the f32 scratch (single final store to o_ref).
        contrib = jnp.dot(ctx, wo_ref[hg], preferred_element_type=f32)          # (Tq, D)

        @pl.when(hg == 0)
        def _():
            acc_ref[...] = jnp.zeros_like(acc_ref)

        acc_ref[...] += contrib

        # NOTE: this accumulator pattern requires the head-group axis to stay
        # the LAST grid axis and be marked "arbitrary".
        @pl.when(hg == pl.num_programs(2) - 1)
        def _():
            o_ref[0] = (acc_ref[...] + bo_ref[...]).astype(o_ref.dtype)

    if self_attn:
        def kernel(xq_ref, xkv_ref, wq_ref, wkv_ref, wo_ref,
                   bq_ref, bkv_ref, bo_ref, o_ref, acc_ref):
            hg = pl.program_id(2)
            # Softmax scale already folded into wq/bq by the wrapper.
            q = jnp.dot(xq_ref[0], wq_ref[hg],
                        preferred_element_type=f32) + bq_ref[hg]        # (Tq, G)
            kv = jnp.dot(xkv_ref[0], wkv_ref[hg],
                         preferred_element_type=f32) + bkv_ref[hg]      # (Skv, 2G)
            _attn_and_project(hg, q, kv[:, :G], kv[:, G:],
                              wo_ref, bo_ref, o_ref, acc_ref)
    else:
        def kernel(xq_ref, xk_ref, xv_ref, wq_ref, wk_ref, wv_ref, wo_ref,
                   bq_ref, bk_ref, bv_ref, bo_ref, o_ref, acc_ref):
            hg = pl.program_id(2)
            q = jnp.dot(xq_ref[0], wq_ref[hg],
                        preferred_element_type=f32) + bq_ref[hg]        # (Tq, G)
            k = jnp.dot(xk_ref[0], wk_ref[hg],
                        preferred_element_type=f32) + bk_ref[hg]        # (Skv, G)
            v = jnp.dot(xv_ref[0], wv_ref[hg],
                        preferred_element_type=f32) + bv_ref[hg]        # (Skv, G)
            _attn_and_project(hg, q, k, v, wo_ref, bo_ref, o_ref, acc_ref)

    return kernel


def multi_head_attention(query, key, value, params, num_heads, *,
                         q_tile=None, heads_per_group=None):
    """query: (B, Sq, D); key/value: (B, Skv, D).  params are torch-Linear
    equivalent with weights stored as (in_features, out_features) and biases
    as (1, D)."""
    B, Sq, D = query.shape
    Bk, Skv, Dk = key.shape
    assert value.shape == key.shape and Bk == B and Dk == D
    H = num_heads
    assert D % H == 0
    Dh = D // H

    self_attn = (query is key) and (key is value)

    Hb = heads_per_group or _pick_heads_per_group(H, Dh)
    assert H % Hb == 0
    HG = H // Hb
    G = Hb * Dh

    Tq = q_tile or _pick_q_tile(Sq)
    assert Sq % Tq == 0
    QT = Sq // Tq

    wq, bq, wk, bk, wv, bv, wo, bo = params
    scale = 1.0 / math.sqrt(Dh)
    f32, bf16 = jnp.float32, jnp.bfloat16

    # Wrapper-side layout plumbing (runs once, outside the kernel).
    def group_w(w):                      # (D, D) -> (HG, D, G); head groups in lanes
        return jnp.transpose(w.reshape(D, HG, G), (1, 0, 2))

    def group_b(b):                      # (1, D) -> (HG, 1, G)
        return b.reshape(HG, G)[:, None, :]

    wq_g = group_w(wq * scale).astype(bf16)      # fold softmax scale into Wq/bq
    bq_g = group_b(bq * scale).astype(f32)
    wo_g = wo.reshape(HG, G, D).astype(bf16)     # per-head-group rows of output proj
    bo_f = bo.astype(f32)

    xq = query.astype(bf16)                      # bf16 activations (wrapper-side cast)

    const3 = lambda b, qt, hg: (0, 0, 0)
    def resident(arr):                           # fully VMEM-resident weights/biases
        return pl.BlockSpec(arr.shape, const3)

    xq_spec = pl.BlockSpec((1, Tq, D), lambda b, qt, hg: (b, qt, 0))
    xkv_spec = pl.BlockSpec((1, Skv, D), lambda b, qt, hg: (b, 0, 0))
    out_spec = pl.BlockSpec((1, Tq, D), lambda b, qt, hg: (b, qt, 0))
    bo_spec = pl.BlockSpec((1, D), lambda b, qt, hg: (0, 0))

    if self_attn:
        # Fused K/V projection weights; pass the activation once as a full
        # (Skv, D) block + once as the (Tq, D) query-tile view.
        wkv_g = jnp.concatenate([group_w(wk), group_w(wv)], axis=-1).astype(bf16)
        bkv_g = jnp.concatenate([group_b(bk), group_b(bv)], axis=-1).astype(f32)
        inputs = (xq, xq, wq_g, wkv_g, wo_g, bq_g, bkv_g, bo_f)
        in_specs = [xq_spec, xkv_spec,
                    resident(wq_g), resident(wkv_g), resident(wo_g),
                    resident(bq_g), resident(bkv_g), bo_spec]
        n_act = 2
    else:
        wk_g = group_w(wk).astype(bf16)
        wv_g = group_w(wv).astype(bf16)
        bk_g = group_b(bk).astype(f32)
        bv_g = group_b(bv).astype(f32)
        xk = key.astype(bf16)
        xv = value.astype(bf16)
        inputs = (xq, xk, xv, wq_g, wk_g, wv_g, wo_g, bq_g, bk_g, bv_g, bo_f)
        in_specs = [xq_spec, xkv_spec, xkv_spec,
                    resident(wq_g), resident(wk_g), resident(wv_g), resident(wo_g),
                    resident(bq_g), resident(bk_g), resident(bv_g), bo_spec]
        n_act = 3

    # Working-set estimate -> explicit VMEM budget (clamped to 64 MiB so the
    # same tiling is valid on v7x; on v6e this could be raised toward 128 MiB).
    resident_bytes = sum(int(a.size) * a.dtype.itemsize for a in inputs[n_act:])
    act_block_bytes = 2 * (Tq * D * 2 + (n_act - 1) * Skv * D * 2)   # double-buffered bf16
    out_block_bytes = 2 * Tq * D * query.dtype.itemsize
    scratch_bytes = Tq * D * 4
    score_bytes = 6 * Tq * Skv * 4                                   # softmax temporaries
    est = resident_bytes + act_block_bytes + out_block_bytes + scratch_bytes + score_bytes
    vmem_limit = int(min(64 * 2**20, max(32 * 2**20, 2 * est)))

    kernel = _make_kernel(self_attn, Hb, Dh)

    return pl.pallas_call(
        kernel,
        out_shape=jax.ShapeDtypeStruct((B, Sq, D), query.dtype),
        grid_spec=pltpu.PrefetchScalarGridSpec(
            num_scalar_prefetch=0,
            grid=(B, QT, HG),                    # head-group (reduction) axis last
            in_specs=in_specs,
            out_specs=out_spec,
            scratch_shapes=[pltpu.VMEM((Tq, D), jnp.float32)]),
        compiler_params=pltpu.CompilerParams(
            dimension_semantics=("parallel", "parallel", "arbitrary"),
            vmem_limit_bytes=vmem_limit),
    )(*inputs)


def _reference(query, key, value, params, num_heads):
    # Pure-JAX f32 reference mirroring the PyTorch forward, for verification.
    wq, bq, wk, bk, wv, bv, wo, bo = params
    B, Sq, D = query.shape
    Dh = D // num_heads

    def proj(x, w, b):
        return x @ w + b

    def split_heads(x):
        return x.reshape(x.shape[0], x.shape[1], num_heads, Dh).transpose(0, 2, 1, 3)

    q = split_heads(proj(query, wq, bq))
    k = split_heads(proj(key, wk, bk))
    v = split_heads(proj(value, wv, bv))

    scores = jnp.einsum("bhqd,bhkd->bhqk", q, k) / math.sqrt(Dh)
    attn = jax.nn.softmax(scores, axis=-1)
    out = jnp.einsum("bhqk,bhkd->bhqd", attn, v)
    out = out.transpose(0, 2, 1, 3).reshape(B, Sq, D)
    return out @ wo + bo


if __name__ == "__main__":
    d_model = 32
    num_heads = 4
    batch = 2
    seq = 8

    key0 = jax.random.PRNGKey(0)
    keys = jax.random.split(key0, 12)

    def init_w(k):
        return (jax.random.uniform(k, (d_model, d_model), jnp.float32) - 0.5) * 0.2

    def init_b(k):
        return (jax.random.uniform(k, (1, d_model), jnp.float32) - 0.5) * 0.2

    params = (
        init_w(keys[0]), init_b(keys[1]),   # query_linear
        init_w(keys[2]), init_b(keys[3]),   # key_linear
        init_w(keys[4]), init_b(keys[5]),   # value_linear
        init_w(keys[6]), init_b(keys[7]),   # output_linear
    )

    query = jax.random.normal(keys[8], (batch, seq, d_model), jnp.float32)
    key_in = jax.random.normal(keys[9], (batch, seq, d_model), jnp.float32)
    value = jax.random.normal(keys[10], (batch, seq, d_model), jnp.float32)

    tol = dict(atol=3e-2, rtol=3e-2)  # bf16 matmuls + approx reciprocal vs f32 ref

    # 1) cross-attention path (distinct q/k/v), default tiling.
    out = jax.block_until_ready(
        multi_head_attention(query, key_in, value, params, num_heads))
    ref = _reference(query, key_in, value, params, num_heads)
    assert out.shape == (batch, seq, d_model)
    assert jnp.allclose(out, ref, **tol), "cross-attention mismatch vs reference"

    # 2) self-attention path (q is k is v): fused K/V projection, deduped DMA.
    out_sa = jax.block_until_ready(
        multi_head_attention(query, query, query, params, num_heads))
    ref_sa = _reference(query, query, query, params, num_heads)
    assert jnp.allclose(out_sa, ref_sa, **tol), "self-attention mismatch vs reference"

    # 3) exercise query tiling (QT=2) + multiple head groups (HG=2 accumulation).
    seq2 = 16
    q2 = jax.random.normal(keys[11], (batch, seq2, d_model), jnp.float32)
    k2 = jax.random.normal(keys[9], (batch, seq2, d_model), jnp.float32)
    v2 = jax.random.normal(keys[10], (batch, seq2, d_model), jnp.float32)
    out2 = jax.block_until_ready(
        multi_head_attention(q2, k2, v2, params, num_heads,
                             q_tile=8, heads_per_group=2))
    ref2 = _reference(q2, k2, v2, params, num_heads)
    assert jnp.allclose(out2, ref2, **tol), "tiled/grouped mismatch vs reference"

    print("KERNEL_OK")
</pallas_src>

<mosaic_0001>
module attributes {stable_mosaic.version = 11 : i64} {
  func.func @kernel(%arg0: i32, %arg1: i32, %arg2: i32, %arg3: memref<1x8x32xbf16, #tpu.memory_space<vmem>>, %arg4: memref<1x8x32xbf16, #tpu.memory_space<vmem>>, %arg5: memref<1x8x32xbf16, #tpu.memory_space<vmem>>, %arg6: memref<1x32x32xbf16, #tpu.memory_space<vmem>>, %arg7: memref<1x32x32xbf16, #tpu.memory_space<vmem>>, %arg8: memref<1x32x32xbf16, #tpu.memory_space<vmem>>, %arg9: memref<1x32x32xbf16, #tpu.memory_space<vmem>>, %arg10: memref<1x1x32xf32, #tpu.memory_space<vmem>>, %arg11: memref<1x1x32xf32, #tpu.memory_space<vmem>>, %arg12: memref<1x1x32xf32, #tpu.memory_space<vmem>>, %arg13: memref<1x32xf32, #tpu.memory_space<vmem>>, %arg14: memref<1x8x32xf32, #tpu.memory_space<vmem>>, %arg15: memref<8x32xf32, #tpu.memory_space<vmem>>) attributes {dimension_semantics = [#tpu.dimension_semantics<parallel>, #tpu.dimension_semantics<parallel>, #tpu.dimension_semantics<arbitrary>], iteration_bounds = array<i64: 2, 1, 1>, scalar_prefetch = 0 : i64, scratch_operands = 1 : i64, tpu.core_type = #tpu.core_type<tc>, window_params = [{transform_indices = @transform_0, window_bounds = array<i64: 1, 8, 32>}, {transform_indices = @transform_1, window_bounds = array<i64: 1, 8, 32>}, {transform_indices = @transform_2, window_bounds = array<i64: 1, 8, 32>}, {pipeline_mode = #tpu.pipeline_mode<synchronous>, transform_indices = @transform_3, window_bounds = array<i64: 1, 32, 32>}, {pipeline_mode = #tpu.pipeline_mode<synchronous>, transform_indices = @transform_4, window_bounds = array<i64: 1, 32, 32>}, {pipeline_mode = #tpu.pipeline_mode<synchronous>, transform_indices = @transform_5, window_bounds = array<i64: 1, 32, 32>}, {pipeline_mode = #tpu.pipeline_mode<synchronous>, transform_indices = @transform_6, window_bounds = array<i64: 1, 32, 32>}, {pipeline_mode = #tpu.pipeline_mode<synchronous>, transform_indices = @transform_7, window_bounds = array<i64: 1, 1, 32>}, {pipeline_mode = #tpu.pipeline_mode<synchronous>, transform_indices = @transform_8, window_bounds = array<i64: 1, 1, 32>}, {pipeline_mode = #tpu.pipeline_mode<synchronous>, transform_indices = @transform_9, window_bounds = array<i64: 1, 1, 32>}, {pipeline_mode = #tpu.pipeline_mode<synchronous>, transform_indices = @transform_10, window_bounds = array<i64: 1, 32>}, {transform_indices = @transform_11, window_bounds = array<i64: 1, 8, 32>}]} {
    %c0 = arith.constant 0 : index
    %c0_0 = arith.constant 0 : index
    %c0_1 = arith.constant 0 : index
    %0 = vector.load %arg3[%c0, %c0_0, %c0_1] : memref<1x8x32xbf16, #tpu.memory_space<vmem>>, vector<1x8x32xbf16>
    %1 = vector.shape_cast %0 : vector<1x8x32xbf16> to vector<8x32xbf16>
    %2 = arith.index_cast %arg2 : i32 to index
    %c0_2 = arith.constant 0 : index
    %c0_3 = arith.constant 0 : index
    %3 = vector.load %arg6[%2, %c0_2, %c0_3] : memref<1x32x32xbf16, #tpu.memory_space<vmem>>, vector<1x32x32xbf16>
    %4 = vector.shape_cast %3 : vector<1x32x32xbf16> to vector<32x32xbf16>
    %cst = arith.constant dense<0.000000e+00> : vector<8x32xf32>
    %5 = tpu.matmul %1, %4, %cst {dimension_numbers = #tpu.dot_dimension_numbers<[1], [0], [0], [1], [0, 0, 1, 1], [], []>} : vector<8x32xbf16>, vector<32x32xbf16>, vector<8x32xf32> -> vector<8x32xf32>
    %6 = arith.index_cast %arg2 : i32 to index
    %c0_4 = arith.constant 0 : index
    %c0_5 = arith.constant 0 : index
    %7 = vector.load %arg10[%6, %c0_4, %c0_5] : memref<1x1x32xf32, #tpu.memory_space<vmem>>, vector<1x1x32xf32>
    %8 = vector.shape_cast %7 : vector<1x1x32xf32> to vector<1x32xf32>
    %9 = vector.broadcast %8 : vector<1x32xf32> to vector<8x32xf32>
    %10 = arith.addf %5, %9 : vector<8x32xf32>
    %c0_6 = arith.constant 0 : index
    %c0_7 = arith.constant 0 : index
    %c0_8 = arith.constant 0 : index
    %11 = vector.load %arg4[%c0_6, %c0_7, %c0_8] : memref<1x8x32xbf16, #tpu.memory_space<vmem>>, vector<1x8x32xbf16>
    %12 = vector.shape_cast %11 : vector<1x8x32xbf16> to vector<8x32xbf16>
    %13 = arith.index_cast %arg2 : i32 to index
    %c0_9 = arith.constant 0 : index
    %c0_10 = arith.constant 0 : index
    %14 = vector.load %arg7[%13, %c0_9, %c0_10] : memref<1x32x32xbf16, #tpu.memory_space<vmem>>, vector<1x32x32xbf16>
    %15 = vector.shape_cast %14 : vector<1x32x32xbf16> to vector<32x32xbf16>
    %cst_11 = arith.constant dense<0.000000e+00> : vector<8x32xf32>
    %16 = tpu.matmul %12, %15, %cst_11 {dimension_numbers = #tpu.dot_dimension_numbers<[1], [0], [0], [1], [0, 0, 1, 1], [], []>} : vector<8x32xbf16>, vector<32x32xbf16>, vector<8x32xf32> -> vector<8x32xf32>
    %17 = arith.index_cast %arg2 : i32 to index
    %c0_12 = arith.constant 0 : index
    %c0_13 = arith.constant 0 : index
    %18 = vector.load %arg11[%17, %c0_12, %c0_13] : memref<1x1x32xf32, #tpu.memory_space<vmem>>, vector<1x1x32xf32>
    %19 = vector.shape_cast %18 : vector<1x1x32xf32> to vector<1x32xf32>
    %20 = vector.broadcast %19 : vector<1x32xf32> to vector<8x32xf32>
    %21 = arith.addf %16, %20 : vector<8x32xf32>
    %c0_14 = arith.constant 0 : index
    %c0_15 = arith.constant 0 : index
    %c0_16 = arith.constant 0 : index
    %22 = vector.load %arg5[%c0_14, %c0_15, %c0_16] : memref<1x8x32xbf16, #tpu.memory_space<vmem>>, vector<1x8x32xbf16>
    %23 = vector.shape_cast %22 : vector<1x8x32xbf16> to vector<8x32xbf16>
    %24 = arith.index_cast %arg2 : i32 to index
    %c0_17 = arith.constant 0 : index
    %c0_18 = arith.constant 0 : index
    %25 = vector.load %arg8[%24, %c0_17, %c0_18] : memref<1x32x32xbf16, #tpu.memory_space<vmem>>, vector<1x32x32xbf16>
    %26 = vector.shape_cast %25 : vector<1x32x32xbf16> to vector<32x32xbf16>
    %cst_19 = arith.constant dense<0.000000e+00> : vector<8x32xf32>
    %27 = tpu.matmul %23, %26, %cst_19 {dimension_numbers = #tpu.dot_dimension_numbers<[1], [0], [0], [1], [0, 0, 1, 1], [], []>} : vector<8x32xbf16>, vector<32x32xbf16>, vector<8x32xf32> -> vector<8x32xf32>
    %28 = arith.index_cast %arg2 : i32 to index
    %c0_20 = arith.constant 0 : index
    %c0_21 = arith.constant 0 : index
    %29 = vector.load %arg12[%28, %c0_20, %c0_21] : memref<1x1x32xf32, #tpu.memory_space<vmem>>, vector<1x1x32xf32>
    %30 = vector.shape_cast %29 : vector<1x1x32xf32> to vector<1x32xf32>
    %31 = vector.broadcast %30 : vector<1x32xf32> to vector<8x32xf32>
    %32 = arith.addf %27, %31 : vector<8x32xf32>
    %33 = vector.extract_strided_slice %10 {offsets = [0, 0], sizes = [8, 8], strides = [1, 1]} : vector<8x32xf32> to vector<8x8xf32>
    %34 = arith.truncf %33 : vector<8x8xf32> to vector<8x8xbf16>
    %35 = vector.extract_strided_slice %21 {offsets = [0, 0], sizes = [8, 8], strides = [1, 1]} : vector<8x32xf32> to vector<8x8xf32>
    %36 = arith.truncf %35 : vector<8x8xf32> to vector<8x8xbf16>
    %37 = vector.extract_strided_slice %32 {offsets = [0, 0], sizes = [8, 8], strides = [1, 1]} : vector<8x32xf32> to vector<8x8xf32>
    %38 = arith.truncf %37 : vector<8x8xf32> to vector<8x8xbf16>
    %cst_22 = arith.constant dense<0.000000e+00> : vector<8x8xf32>
    %39 = tpu.matmul %34, %36, %cst_22 {dimension_numbers = #tpu.dot_dimension_numbers<[1], [1], [0], [0], [0, 0, 1, 0], [], []>} : vector<8x8xbf16>, vector<8x8xbf16>, vector<8x8xf32> -> vector<8x8xf32>
    %cst_23 = arith.constant dense<0xFF800000> : vector<8xf32>
    %40 = vector.multi_reduction <maximumf>, %39, %cst_23 [1] : vector<8x8xf32> to vector<8xf32>
    %41 = vector.shape_cast %40 : vector<8xf32> to vector<8x1xf32>
    %42 = vector.broadcast %41 : vector<8x1xf32> to vector<8x8xf32>
    %43 = arith.subf %39, %42 : vector<8x8xf32>
    %44 = math.exp %43 : vector<8x8xf32>
    %cst_24 = arith.constant dense<0.000000e+00> : vector<8xf32>
    %45 = vector.multi_reduction <add>, %44, %cst_24 [1] : vector<8x8xf32> to vector<8xf32>
    %46 = vector.shape_cast %45 : vector<8xf32> to vector<8x1xf32>
    %47 = tpu.reciprocal %46 {approx = true} : vector<8x1xf32> -> vector<8x1xf32>
    %48 = vector.broadcast %47 : vector<8x1xf32> to vector<8x8xf32>
    %49 = arith.mulf %44, %48 : vector<8x8xf32>
    %50 = arith.truncf %49 : vector<8x8xf32> to vector<8x8xbf16>
    %cst_25 = arith.constant dense<0.000000e+00> : vector<8x8xf32>
    %51 = tpu.matmul %50, %38, %cst_25 {dimension_numbers = #tpu.dot_dimension_numbers<[1], [0], [0], [1], [0, 0, 1, 1], [], []>} : vector<8x8xbf16>, vector<8x8xbf16>, vector<8x8xf32> -> vector<8x8xf32>
    %52 = arith.truncf %51 : vector<8x8xf32> to vector<8x8xbf16>
    %53 = vector.extract_strided_slice %10 {offsets = [0, 8], sizes = [8, 8], strides = [1, 1]} : vector<8x32xf32> to vector<8x8xf32>
    %54 = arith.truncf %53 : vector<8x8xf32> to vector<8x8xbf16>
    %55 = vector.extract_strided_slice %21 {offsets = [0, 8], sizes = [8, 8], strides = [1, 1]} : vector<8x32xf32> to vector<8x8xf32>
    %56 = arith.truncf %55 : vector<8x8xf32> to vector<8x8xbf16>
    %57 = vector.extract_strided_slice %32 {offsets = [0, 8], sizes = [8, 8], strides = [1, 1]} : vector<8x32xf32> to vector<8x8xf32>
    %58 = arith.truncf %57 : vector<8x8xf32> to vector<8x8xbf16>
    %cst_26 = arith.constant dense<0.000000e+00> : vector<8x8xf32>
    %59 = tpu.matmul %54, %56, %cst_26 {dimension_numbers = #tpu.dot_dimension_numbers<[1], [1], [0], [0], [0, 0, 1, 0], [], []>} : vector<8x8xbf16>, vector<8x8xbf16>, vector<8x8xf32> -> vector<8x8xf32>
    %cst_27 = arith.constant dense<0xFF800000> : vector<8xf32>
    %60 = vector.multi_reduction <maximumf>, %59, %cst_27 [1] : vector<8x8xf32> to vector<8xf32>
    %61 = vector.shape_cast %60 : vector<8xf32> to vector<8x1xf32>
    %62 = vector.broadcast %61 : vector<8x1xf32> to vector<8x8xf32>
    %63 = arith.subf %59, %62 : vector<8x8xf32>
    %64 = math.exp %63 : vector<8x8xf32>
    %cst_28 = arith.constant dense<0.000000e+00> : vector<8xf32>
    %65 = vector.multi_reduction <add>, %64, %cst_28 [1] : vector<8x8xf32> to vector<8xf32>
    %66 = vector.shape_cast %65 : vector<8xf32> to vector<8x1xf32>
    %67 = tpu.reciprocal %66 {approx = true} : vector<8x1xf32> -> vector<8x1xf32>
    %68 = vector.broadcast %67 : vector<8x1xf32> to vector<8x8xf32>
    %69 = arith.mulf %64, %68 : vector<8x8xf32>
    %70 = arith.truncf %69 : vector<8x8xf32> to vector<8x8xbf16>
    %cst_29 = arith.constant dense<0.000000e+00> : vector<8x8xf32>
    %71 = tpu.matmul %70, %58, %cst_29 {dimension_numbers = #tpu.dot_dimension_numbers<[1], [0], [0], [1], [0, 0, 1, 1], [], []>} : vector<8x8xbf16>, vector<8x8xbf16>, vector<8x8xf32> -> vector<8x8xf32>
    %72 = arith.truncf %71 : vector<8x8xf32> to vector<8x8xbf16>
    %73 = vector.extract_strided_slice %10 {offsets = [0, 16], sizes = [8, 8], strides = [1, 1]} : vector<8x32xf32> to vector<8x8xf32>
    %74 = arith.truncf %73 : vector<8x8xf32> to vector<8x8xbf16>
    %75 = vector.extract_strided_slice %21 {offsets = [0, 16], sizes = [8, 8], strides = [1, 1]} : vector<8x32xf32> to vector<8x8xf32>
    %76 = arith.truncf %75 : vector<8x8xf32> to vector<8x8xbf16>
    %77 = vector.extract_strided_slice %32 {offsets = [0, 16], sizes = [8, 8], strides = [1, 1]} : vector<8x32xf32> to vector<8x8xf32>
    %78 = arith.truncf %77 : vector<8x8xf32> to vector<8x8xbf16>
    %cst_30 = arith.constant dense<0.000000e+00> : vector<8x8xf32>
    %79 = tpu.matmul %74, %76, %cst_30 {dimension_numbers = #tpu.dot_dimension_numbers<[1], [1], [0], [0], [0, 0, 1, 0], [], []>} : vector<8x8xbf16>, vector<8x8xbf16>, vector<8x8xf32> -> vector<8x8xf32>
    %cst_31 = arith.constant dense<0xFF800000> : vector<8xf32>
    %80 = vector.multi_reduction <maximumf>, %79, %cst_31 [1] : vector<8x8xf32> to vector<8xf32>
    %81 = vector.shape_cast %80 : vector<8xf32> to vector<8x1xf32>
    %82 = vector.broadcast %81 : vector<8x1xf32> to vector<8x8xf32>
    %83 = arith.subf %79, %82 : vector<8x8xf32>
    %84 = math.exp %83 : vector<8x8xf32>
    %cst_32 = arith.constant dense<0.000000e+00> : vector<8xf32>
    %85 = vector.multi_reduction <add>, %84, %cst_32 [1] : vector<8x8xf32> to vector<8xf32>
    %86 = vector.shape_cast %85 : vector<8xf32> to vector<8x1xf32>
    %87 = tpu.reciprocal %86 {approx = true} : vector<8x1xf32> -> vector<8x1xf32>
    %88 = vector.broadcast %87 : vector<8x1xf32> to vector<8x8xf32>
    %89 = arith.mulf %84, %88 : vector<8x8xf32>
    %90 = arith.truncf %89 : vector<8x8xf32> to vector<8x8xbf16>
    %cst_33 = arith.constant dense<0.000000e+00> : vector<8x8xf32>
    %91 = tpu.matmul %90, %78, %cst_33 {dimension_numbers = #tpu.dot_dimension_numbers<[1], [0], [0], [1], [0, 0, 1, 1], [], []>} : vector<8x8xbf16>, vector<8x8xbf16>, vector<8x8xf32> -> vector<8x8xf32>
    %92 = arith.truncf %91 : vector<8x8xf32> to vector<8x8xbf16>
    %93 = vector.extract_strided_slice %10 {offsets = [0, 24], sizes = [8, 8], strides = [1, 1]} : vector<8x32xf32> to vector<8x8xf32>
    %94 = arith.truncf %93 : vector<8x8xf32> to vector<8x8xbf16>
    %95 = vector.extract_strided_slice %21 {offsets = [0, 24], sizes = [8, 8], strides = [1, 1]} : vector<8x32xf32> to vector<8x8xf32>
    %96 = arith.truncf %95 : vector<8x8xf32> to vector<8x8xbf16>
    %97 = vector.extract_strided_slice %32 {offsets = [0, 24], sizes = [8, 8], strides = [1, 1]} : vector<8x32xf32> to vector<8x8xf32>
    %98 = arith.truncf %97 : vector<8x8xf32> to vector<8x8xbf16>
    %cst_34 = arith.constant dense<0.000000e+00> : vector<8x8xf32>
    %99 = tpu.matmul %94, %96, %cst_34 {dimension_numbers = #tpu.dot_dimension_numbers<[1], [1], [0], [0], [0, 0, 1, 0], [], []>} : vector<8x8xbf16>, vector<8x8xbf16>, vector<8x8xf32> -> vector<8x8xf32>
    %cst_35 = arith.constant dense<0xFF800000> : vector<8xf32>
    %100 = vector.multi_reduction <maximumf>, %99, %cst_35 [1] : vector<8x8xf32> to vector<8xf32>
    %101 = vector.shape_cast %100 : vector<8xf32> to vector<8x1xf32>
    %102 = vector.broadcast %101 : vector<8x1xf32> to vector<8x8xf32>
    %103 = arith.subf %99, %102 : vector<8x8xf32>
    %104 = math.exp %103 : vector<8x8xf32>
    %cst_36 = arith.constant dense<0.000000e+00> : vector<8xf32>
    %105 = vector.multi_reduction <add>, %104, %cst_36 [1] : vector<8x8xf32> to vector<8xf32>
    %106 = vector.shape_cast %105 : vector<8xf32> to vector<8x1xf32>
    %107 = tpu.reciprocal %106 {approx = true} : vector<8x1xf32> -> vector<8x1xf32>
    %108 = vector.broadcast %107 : vector<8x1xf32> to vector<8x8xf32>
    %109 = arith.mulf %104, %108 : vector<8x8xf32>
    %110 = arith.truncf %109 : vector<8x8xf32> to vector<8x8xbf16>
    %cst_37 = arith.constant dense<0.000000e+00> : vector<8x8xf32>
    %111 = tpu.matmul %110, %98, %cst_37 {dimension_numbers = #tpu.dot_dimension_numbers<[1], [0], [0], [1], [0, 0, 1, 1], [], []>} : vector<8x8xbf16>, vector<8x8xbf16>, vector<8x8xf32> -> vector<8x8xf32>
    %112 = arith.truncf %111 : vector<8x8xf32> to vector<8x8xbf16>
    %113 = tpu.concatenate %52, %72, %92, %112 in 1 : vector<8x8xbf16>, vector<8x8xbf16>, vector<8x8xbf16>, vector<8x8xbf16> -> vector<8x32xbf16>
    %114 = arith.index_cast %arg2 : i32 to index
    %c0_38 = arith.constant 0 : index
    %c0_39 = arith.constant 0 : index
    %115 = vector.load %arg9[%114, %c0_38, %c0_39] : memref<1x32x32xbf16, #tpu.memory_space<vmem>>, vector<1x32x32xbf16>
    %116 = vector.shape_cast %115 : vector<1x32x32xbf16> to vector<32x32xbf16>
    %cst_40 = arith.constant dense<0.000000e+00> : vector<8x32xf32>
    %117 = tpu.matmul %113, %116, %cst_40 {dimension_numbers = #tpu.dot_dimension_numbers<[1], [0], [0], [1], [0, 0, 1, 1], [], []>} : vector<8x32xbf16>, vector<32x32xbf16>, vector<8x32xf32> -> vector<8x32xf32>
    %c0_i32 = arith.constant 0 : i32
    %118 = arith.cmpi eq, %arg2, %c0_i32 : i32
    %119 = arith.extui %118 : i1 to i32
    %c0_i32_41 = arith.constant 0 : i32
    %120 = arith.cmpi ne, %119, %c0_i32_41 : i32
    scf.if %120 {
      %cst_48 = arith.constant 0.000000e+00 : f32
      %127 = vector.broadcast %cst_48 : f32 to vector<8x32xf32>
      %c0_49 = arith.constant 0 : index
      %c0_50 = arith.constant 0 : index
      %128 = vector.load %arg15[%c0_49, %c0_50] : memref<8x32xf32, #tpu.memory_space<vmem>>, vector<8x32xf32>
      tpu.vector_store %arg15[%c0_49, %c0_50], %127 {strides = array<i32>} : memref<8x32xf32, #tpu.memory_space<vmem>>, vector<8x32xf32>,
    } else {
    }
    %c0_42 = arith.constant 0 : index
    %c0_43 = arith.constant 0 : index
    %121 = vector.load %arg15[%c0_42, %c0_43] : memref<8x32xf32, #tpu.memory_space<vmem>>, vector<8x32xf32>
    %122 = arith.addf %121, %117 : vector<8x32xf32>
    %c0_44 = arith.constant 0 : index
    %c0_45 = arith.constant 0 : index
    %123 = vector.load %arg15[%c0_44, %c0_45] : memref<8x32xf32, #tpu.memory_space<vmem>>, vector<8x32xf32>
    tpu.vector_store %arg15[%c0_44, %c0_45], %122 {strides = array<i32>} : memref<8x32xf32, #tpu.memory_space<vmem>>, vector<8x32xf32>,
    %c0_i32_46 = arith.constant 0 : i32
    %124 = arith.cmpi eq, %arg2, %c0_i32_46 : i32
    %125 = arith.extui %124 : i1 to i32
    %c0_i32_47 = arith.constant 0 : i32
    %126 = arith.cmpi ne, %125, %c0_i32_47 : i32
    scf.if %126 {
      %c0_48 = arith.constant 0 : index
      %c0_49 = arith.constant 0 : index
      %127 = vector.load %arg15[%c0_48, %c0_49] : memref<8x32xf32, #tpu.memory_space<vmem>>, vector<8x32xf32>
      %c0_50 = arith.constant 0 : index
      %c0_51 = arith.constant 0 : index
      %128 = vector.load %arg13[%c0_50, %c0_51] : memref<1x32xf32, #tpu.memory_space<vmem>>, vector<1x32xf32>
      %129 = vector.broadcast %128 : vector<1x32xf32> to vector<8x32xf32>
      %130 = arith.addf %127, %129 : vector<8x32xf32>
      %c0_52 = arith.constant 0 : index
      %c0_53 = arith.constant 0 : index
      %c0_54 = arith.constant 0 : index
      %131 = vector.load %arg14[%c0_52, %c0_53, %c0_54] : memref<1x8x32xf32, #tpu.memory_space<vmem>>, vector<1x8x32xf32>
      %132 = vector.shape_cast %131 : vector<1x8x32xf32> to vector<8x32xf32>
      %133 = vector.shape_cast %130 : vector<8x32xf32> to vector<1x8x32xf32>
      tpu.vector_store %arg14[%c0_52, %c0_53, %c0_54], %133 {strides = array<i32>} : memref<1x8x32xf32, #tpu.memory_space<vmem>>, vector<1x8x32xf32>,
    } else {
    }
    return
  }
  func.func @transform_0(%arg0: i32, %arg1: i32, %arg2: i32) -> (i32, i32, i32) {
    %c0_i32 = arith.constant 0 : i32
    %c0_i32_0 = arith.constant 0 : i32
    return %arg0, %arg1, %c0_i32 : i32, i32, i32
  }
  func.func @transform_1(%arg0: i32, %arg1: i32, %arg2: i32) -> (i32, i32, i32) {
    %c0_i32 = arith.constant 0 : i32
    %c0_i32_0 = arith.constant 0 : i32
    %c0_i32_1 = arith.constant 0 : i32
    return %arg0, %c0_i32, %c0_i32_0 : i32, i32, i32
  }
  func.func @transform_2(%arg0: i32, %arg1: i32, %arg2: i32) -> (i32, i32, i32) {
    %c0_i32 = arith.constant 0 : i32
    %c0_i32_0 = arith.constant 0 : i32
    %c0_i32_1 = arith.constant 0 : i32
    return %arg0, %c0_i32, %c0_i32_0 : i32, i32, i32
  }
  func.func @transform_3(%arg0: i32, %arg1: i32, %arg2: i32) -> (i32, i32, i32) {
    %c0_i32 = arith.constant 0 : i32
    %c0_i32_0 = arith.constant 0 : i32
    %c0_i32_1 = arith.constant 0 : i32
    %c0_i32_2 = arith.constant 0 : i32
    return %c0_i32, %c0_i32_0, %c0_i32_1 : i32, i32, i32
  }
  func.func @transform_4(%arg0: i32, %arg1: i32, %arg2: i32) -> (i32, i32, i32) {
    %c0_i32 = arith.constant 0 : i32
    %c0_i32_0 = arith.constant 0 : i32
    %c0_i32_1 = arith.constant 0 : i32
    %c0_i32_2 = arith.constant 0 : i32
    return %c0_i32, %c0_i32_0, %c0_i32_1 : i32, i32, i32
  }
  func.func @transform_5(%arg0: i32, %arg1: i32, %arg2: i32) -> (i32, i32, i32) {
    %c0_i32 = arith.constant 0 : i32
    %c0_i32_0 = arith.constant 0 : i32
    %c0_i32_1 = arith.constant 0 : i32
    %c0_i32_2 = arith.constant 0 : i32
    return %c0_i32, %c0_i32_0, %c0_i32_1 : i32, i32, i32
  }
  func.func @transform_6(%arg0: i32, %arg1: i32, %arg2: i32) -> (i32, i32, i32) {
    %c0_i32 = arith.constant 0 : i32
    %c0_i32_0 = arith.constant 0 : i32
    %c0_i32_1 = arith.constant 0 : i32
    %c0_i32_2 = arith.constant 0 : i32
    return %c0_i32, %c0_i32_0, %c0_i32_1 : i32, i32, i32
  }
  func.func @transform_7(%arg0: i32, %arg1: i32, %arg2: i32) -> (i32, i32, i32) {
    %c0_i32 = arith.constant 0 : i32
    %c0_i32_0 = arith.constant 0 : i32
    %c0_i32_1 = arith.constant 0 : i32
    %c0_i32_2 = arith.constant 0 : i32
    return %c0_i32, %c0_i32_0, %c0_i32_1 : i32, i32, i32
  }
  func.func @transform_8(%arg0: i32, %arg1: i32, %arg2: i32) -> (i32, i32, i32) {
    %c0_i32 = arith.constant 0 : i32
    %c0_i32_0 = arith.constant 0 : i32
    %c0_i32_1 = arith.constant 0 : i32
    %c0_i32_2 = arith.constant 0 : i32
    return %c0_i32, %c0_i32_0, %c0_i32_1 : i32, i32, i32
  }
  func.func @transform_9(%arg0: i32, %arg1: i32, %arg2: i32) -> (i32, i32, i32) {
    %c0_i32 = arith.constant 0 : i32
    %c0_i32_0 = arith.constant 0 : i32
    %c0_i32_1 = arith.constant 0 : i32
    %c0_i32_2 = arith.constant 0 : i32
    return %c0_i32, %c0_i32_0, %c0_i32_1 : i32, i32, i32
  }
  func.func @transform_10(%arg0: i32, %arg1: i32, %arg2: i32) -> (i32, i32) {
    %c0_i32 = arith.constant 0 : i32
    %c0_i32_0 = arith.constant 0 : i32
    %c0_i32_1 = arith.constant 0 : i32
    return %c0_i32, %c0_i32_0 : i32, i32
  }
  func.func @transform_11(%arg0: i32, %arg1: i32, %arg2: i32) -> (i32, i32, i32) {
    %c0_i32 = arith.constant 0 : i32
    %c0_i32_0 = arith.constant 0 : i32
    return %arg0, %arg1, %c0_i32 : i32, i32, i32
  }
}

</mosaic_0001>

<llo_original>
// kernel: tpu_custom_call.1
$region0: #{tpu_custom_call.1}
  #allocation0 [shape = 'u32[]', space=smem, size = 0x4, offset = 0x4, fixed_abs, tag = 'smem constant byte address 0x4 - core index']
  #allocation1 [shape = 'u32[144,128]{1,0:T(1,128)}', space=vmem, size = 0x12000, scoped, tag = 'internal scratch']
  #allocation2 [shape = 'f32[8,32]{1,0:T(8,128)}', space=vmem, size = 0x1000, scoped, tag = 'scratch operand']
  %s0 = inlined_call_operand.hbm [shape: bf16[2,8,32], index: 0, kind: input, shape index: {}]
  %s1 = inlined_call_operand.hbm [shape: bf16[2,8,32], index: 1, kind: input, shape index: {}]
  %s2 = inlined_call_operand.hbm [shape: bf16[2,8,32], index: 2, kind: input, shape index: {}]
  %s3 = inlined_call_operand.hbm [shape: bf16[1,32,32], index: 3, kind: input, shape index: {}]
  %s4 = inlined_call_operand.hbm [shape: bf16[1,32,32], index: 4, kind: input, shape index: {}]
  %s5 = inlined_call_operand.hbm [shape: bf16[1,32,32], index: 5, kind: input, shape index: {}]
  %s6 = inlined_call_operand.hbm [shape: bf16[1,32,32], index: 6, kind: input, shape index: {}]
  %s7 = inlined_call_operand.vmem [shape: f32[1,1,32], index: 7, kind: input, shape index: {}]
  %s8 = inlined_call_operand.vmem [shape: f32[1,1,32], index: 8, kind: input, shape index: {}]
  %s9 = inlined_call_operand.vmem [shape: f32[1,1,32], index: 9, kind: input, shape index: {}]
  %s10 = inlined_call_operand.vmem [shape: f32[1,32], index: 10, kind: input, shape index: {}]
  %s11 = inlined_call_operand.hbm [shape: f32[2,8,32], index: 11, kind: output, shape index: {}]
  %s12 = sld [smem:[#allocation0]]
  $region113: #{tpu_custom_call.1} parent=0
    _
  %s14 = ssub.s32 1, %s12
  %s15 = scalar_select 0, %s14, %s12
  $region1: #{tpu_custom_call.1} parent=0
    #allocation3 [shape = 'u8[4096]{0}', space=vmem, size = 0x1000, scoped, tag = 'input window, operand 0']
    #allocation4 [shape = 's32[2]{0}', space=sflag, size = 0x8, scoped, tag = 'scoped memory for tpu_custom_call.1']
    #allocation5 [shape = 's32[2]{0}', space=sflag, size = 0x8, scoped, tag = 'scoped memory for tpu_custom_call.1']
    #allocation6 [shape = 'u8[4096]{0}', space=vmem, size = 0x1000, scoped, tag = 'input window, operand 1']
    #allocation7 [shape = 's32[2]{0}', space=sflag, size = 0x8, scoped, tag = 'scoped memory for tpu_custom_call.1']
    #allocation8 [shape = 'u8[4096]{0}', space=vmem, size = 0x1000, scoped, tag = 'input window, operand 2']
    #allocation9 [shape = 'u8[8192]{0}', space=vmem, size = 0x2000, scoped, tag = 'input window, operand 3, single buffered']
    #allocation10 [shape = 's32[1]{0}', space=sflag, size = 0x4, scoped, tag = 'scoped memory for tpu_custom_call.1']
    #allocation11 [shape = 'u8[8192]{0}', space=vmem, size = 0x2000, scoped, tag = 'input window, operand 4, single buffered']
    #allocation12 [shape = 'u8[8192]{0}', space=vmem, size = 0x2000, scoped, tag = 'input window, operand 5, single buffered']
    #allocation13 [shape = 's32[1]{0}', space=sflag, size = 0x4, scoped, tag = 'scoped memory for tpu_custom_call.1']
    #allocation14 [shape = 'u8[8192]{0}', space=vmem, size = 0x2000, scoped, tag = 'input window, operand 6, single buffered']
    #allocation15 [shape = 'u8[8192]{0}', space=vmem, size = 0x2000, scoped, tag = 'output window, operand 0']
    %16 = vsyncpa [#allocation4], 0
    %s17 = scalar_lea.sflag [#allocation4], 1
    %18 = vsyncpa %s17, 0
    %19 = vsyncpa [#allocation7], 0
    %s20 = scalar_lea.sflag [#allocation7], 1
    %21 = vsyncpa %s20, 0
    %22 = vsyncpa [#allocation10], 0
    %23 = vsyncpa [#allocation13], 0
    %24 = vsyncpa [#allocation5], 0
    %s25 = scalar_lea.sflag [#allocation5], 1
    %26 = vsyncpa %s25, 0
    loop: start=0, step=1, limit=4
    $region2: #{tpu_custom_call.1} parent=1 // loop_pre_header
      _
    $region3: #{tpu_custom_call.1} parent=1 // loop_header
      %s28 = sphi 0, %s32
      %p29 = scmp.ge.s32.totalorder %s28, 4
      %s35 = sphi 0, %s54
      %s36 = sphi 0, %s50
      %s37 = sphi 0, %s46
      %s38 = sphi 0, %s35
      %s39 = sphi 0, %s36
      %s40 = sphi 0, %s37
      %s41 = sphi 0, %s38
      %s42 = sphi 0, %s39
      %s43 = sphi 0, %s40
      %s59 = sphi 0, %s61
      %s62 = sphi 0, %s59
      %s63 = sphi 0, %s62
      %s79 = sphi 0, %s63
      %s85 = sphi 0, %s87
      %s88 = sphi 0, %s85
      %s89 = sphi 0, %s88
      %s105 = sphi 0, %s89
      %s111 = sphi 0, %s113
      %s114 = sphi 0, %s111
      %s115 = sphi 0, %s114
      %s131 = sphi 0, %s115
      %s135 = sphi 0, %s135
      %s137 = sphi 0, %s135
      %s138 = sphi 0, %s137
      %s152 = sphi 0, %s138
      %s156 = sphi 0, %s156
      %s158 = sphi 0, %s156
      %s159 = sphi 0, %s158
      %s173 = sphi 0, %s159
      %s177 = sphi 0, %s177
      %s179 = sphi 0, %s177
      %s180 = sphi 0, %s179
      %s194 = sphi 0, %s180
      %s198 = sphi 0, %s198
      %s200 = sphi 0, %s198
      %s201 = sphi 0, %s200
      %s215 = sphi 0, %s201
      %s219 = sphi 0, %s219
      %s221 = sphi 0, %s219
      %s222 = sphi 0, %s221
      %s236 = sphi 0, %s222
      %s240 = sphi 0, %s240
      %s242 = sphi 0, %s240
      %s243 = sphi 0, %s242
      %s257 = sphi 0, %s243
      %s261 = sphi 0, %s261
      %s263 = sphi 0, %s261
      %s264 = sphi 0, %s263
      %s278 = sphi 0, %s264
      %s282 = sphi 0, %s282
      %s284 = sphi 0, %s282
      %s285 = sphi 0, %s284
      %s299 = sphi 0, %s285
      %s307 = sphi 0, %s309
      %s310 = sphi 0, %s307
      %s311 = sphi 0, %s310
      %s327 = sphi 0, %s311
    $region4: #{tpu_custom_call.1} parent=1 // loop_header_branch
      %31 = sbr.rel (%p29) target = $region8
    $region5: #{tpu_custom_call.1} parent=1 // loop_body
      %s33 = ssub.s32 %s28, 1
      %s34 = ssub.s32 %s28, 2
      %s44 = sadd.s32 1, %s37
      %p45 = scmp.ge.s32.totalorder %s44, 1
      %s46 = scalar_select %p45, 0, %s44
      %s47 = sadd.s32 1, %s36
      %s48 = scalar_select %p45, %s47, %s36
      %p49 = scmp.ge.s32.totalorder %s48, 1
      %s50 = scalar_select %p49, 0, %s48
      %s51 = sadd.s32 1, %s35
      %s52 = scalar_select %p49, %s51, %s35
      %p53 = scmp.ge.s32.totalorder %s52, 2
      %s54 = scalar_select %p53, 0, %s52
      %s55 = ssub.s32 %s35, %s54
      %s56 = ssub.s32 %s36, %s50
      %s57 = sor.u32 %s55, %s56
      %p58 = scmp.eq.s32.totalorder %s57, 0
      %s60 = sadd.s32 %s59, 1
      %s61 = scalar_select %p58, %s59, %s60
      %p64 = pneg %p58
      %p65 = scmp.eq.s32.totalorder %s28, 1
      %p66 = por %p64, %p65
      %p67 = scmp.ne.s32.totalorder %s59, %s62
      %p68 = scmp.eq.s32.totalorder %s28, 0
      %p69 = por %p67, %p68
      %p70 = scmp.ne.s32.totalorder %s59, %s62
      %p71 = scmp.eq.s32.totalorder %s33, 1
      %p72 = por %p70, %p71
      %p73 = scmp.ne.s32.totalorder %s62, %s63
      %p74 = scmp.eq.s32.totalorder %s33, 0
      %p75 = por %p73, %p74
      %p76 = scmp.ne.s32.totalorder %s62, %s63
      %p77 = scmp.eq.s32.totalorder %s34, 1
      %p78 = por %p76, %p77
      %p80 = scmp.ne.s32.totalorder %s63, %s79
      %p81 = scmp.eq.s32.totalorder %s34, 0
      %p82 = por %p80, %p81
      %s83 = ssub.s32 %s35, %s54
      %p84 = scmp.eq.s32.totalorder %s83, 0
      %s86 = sadd.s32 %s85, 1
      %s87 = scalar_select %p84, %s85, %s86
      %p90 = pneg %p84
      %p91 = scmp.eq.s32.totalorder %s28, 1
      %p92 = por %p90, %p91
      %p93 = scmp.ne.s32.totalorder %s85, %s88
      %p94 = scmp.eq.s32.totalorder %s28, 0
      %p95 = por %p93, %p94
      %p96 = scmp.ne.s32.totalorder %s85, %s88
      %p97 = scmp.eq.s32.totalorder %s33, 1
      %p98 = por %p96, %p97
      %p99 = scmp.ne.s32.totalorder %s88, %s89
      %p100 = scmp.eq.s32.totalorder %s33, 0
      %p101 = por %p99, %p100
      %p102 = scmp.ne.s32.totalorder %s88, %s89
      %p103 = scmp.eq.s32.totalorder %s34, 1
      %p104 = por %p102, %p103
      %p106 = scmp.ne.s32.totalorder %s89, %s105
      %p107 = scmp.eq.s32.totalorder %s34, 0
      %p108 = por %p106, %p107
      %s109 = ssub.s32 %s35, %s54
      %p110 = scmp.eq.s32.totalorder %s109, 0
      %s112 = sadd.s32 %s111, 1
      %s113 = scalar_select %p110, %s111, %s112
      %p116 = pneg %p110
      %p117 = scmp.eq.s32.totalorder %s28, 1
      %p118 = por %p116, %p117
      %p119 = scmp.ne.s32.totalorder %s111, %s114
      %p120 = scmp.eq.s32.totalorder %s28, 0
      %p121 = por %p119, %p120
      %p122 = scmp.ne.s32.totalorder %s111, %s114
      %p123 = scmp.eq.s32.totalorder %s33, 1
      %p124 = por %p122, %p123
      %p125 = scmp.ne.s32.totalorder %s114, %s115
      %p126 = scmp.eq.s32.totalorder %s33, 0
      %p127 = por %p125, %p126
      %p128 = scmp.ne.s32.totalorder %s114, %s115
      %p129 = scmp.eq.s32.totalorder %s34, 1
      %p130 = por %p128, %p129
      %p132 = scmp.ne.s32.totalorder %s115, %s131
      %p133 = scmp.eq.s32.totalorder %s34, 0
      %p134 = por %p132, %p133
      %s136 = sadd.s32 %s135, 1
      %p139 = scmp.eq.s32.totalorder %s28, 1
      %p140 = scmp.ne.s32.totalorder %s135, %s137
      %p141 = scmp.eq.s32.totalorder %s28, 0
      %p142 = por %p140, %p141
      %p143 = scmp.ne.s32.totalorder %s135, %s137
      %p144 = scmp.eq.s32.totalorder %s33, 1
      %p145 = por %p143, %p144
      %p146 = scmp.ne.s32.totalorder %s137, %s138
      %p147 = scmp.eq.s32.totalorder %s33, 0
      %p148 = por %p146, %p147
      %p149 = scmp.ne.s32.totalorder %s137, %s138
      %p150 = scmp.eq.s32.totalorder %s34, 1
      %p151 = por %p149, %p150
      %p153 = scmp.ne.s32.totalorder %s138, %s152
      %p154 = scmp.eq.s32.totalorder %s34, 0
      %p155 = por %p153, %p154
      %s157 = sadd.s32 %s156, 1
      %p160 = scmp.eq.s32.totalorder %s28, 1
      %p161 = scmp.ne.s32.totalorder %s156, %s158
      %p162 = scmp.eq.s32.totalorder %s28, 0
      %p163 = por %p161, %p162
      %p164 = scmp.ne.s32.totalorder %s156, %s158
      %p165 = scmp.eq.s32.totalorder %s33, 1
      %p166 = por %p164, %p165
      %p167 = scmp.ne.s32.totalorder %s158, %s159
      %p168 = scmp.eq.s32.totalorder %s33, 0
      %p169 = por %p167, %p168
      %p170 = scmp.ne.s32.totalorder %s158, %s159
      %p171 = scmp.eq.s32.totalorder %s34, 1
      %p172 = por %p170, %p171
      %p174 = scmp.ne.s32.totalorder %s159, %s173
      %p175 = scmp.eq.s32.totalorder %s34, 0
      %p176 = por %p174, %p175
      %s178 = sadd.s32 %s177, 1
      %p181 = scmp.eq.s32.totalorder %s28, 1
      %p182 = scmp.ne.s32.totalorder %s177, %s179
      %p183 = scmp.eq.s32.totalorder %s28, 0
      %p184 = por %p182, %p183
      %p185 = scmp.ne.s32.totalorder %s177, %s179
      %p186 = scmp.eq.s32.totalorder %s33, 1
      %p187 = por %p185, %p186
      %p188 = scmp.ne.s32.totalorder %s179, %s180
      %p189 = scmp.eq.s32.totalorder %s33, 0
      %p190 = por %p188, %p189
      %p191 = scmp.ne.s32.totalorder %s179, %s180
      %p192 = scmp.eq.s32.totalorder %s34, 1
      %p193 = por %p191, %p192
      %p195 = scmp.ne.s32.totalorder %s180, %s194
      %p196 = scmp.eq.s32.totalorder %s34, 0
      %p197 = por %p195, %p196
      %s199 = sadd.s32 %s198, 1
      %p202 = scmp.eq.s32.totalorder %s28, 1
      %p203 = scmp.ne.s32.totalorder %s198, %s200
      %p204 = scmp.eq.s32.totalorder %s28, 0
      %p205 = por %p203, %p204
      %p206 = scmp.ne.s32.totalorder %s198, %s200
      %p207 = scmp.eq.s32.totalorder %s33, 1
      %p208 = por %p206, %p207
      %p209 = scmp.ne.s32.totalorder %s200, %s201
      %p210 = scmp.eq.s32.totalorder %s33, 0
      %p211 = por %p209, %p210
      %p212 = scmp.ne.s32.totalorder %s200, %s201
      %p213 = scmp.eq.s32.totalorder %s34, 1
      %p214 = por %p212, %p213
      %p216 = scmp.ne.s32.totalorder %s201, %s215
      %p217 = scmp.eq.s32.totalorder %s34, 0
      %p218 = por %p216, %p217
      %s220 = sadd.s32 %s219, 1
      %p223 = scmp.eq.s32.totalorder %s28, 1
      %p224 = scmp.ne.s32.totalorder %s219, %s221
      %p225 = scmp.eq.s32.totalorder %s28, 0
      %p226 = por %p224, %p225
      %p227 = scmp.ne.s32.totalorder %s219, %s221
      %p228 = scmp.eq.s32.totalorder %s33, 1
      %p229 = por %p227, %p228
      %p230 = scmp.ne.s32.totalorder %s221, %s222
      %p231 = scmp.eq.s32.totalorder %s33, 0
      %p232 = por %p230, %p231
      %p233 = scmp.ne.s32.totalorder %s221, %s222
      %p234 = scmp.eq.s32.totalorder %s34, 1
      %p235 = por %p233, %p234
      %p237 = scmp.ne.s32.totalorder %s222, %s236
      %p238 = scmp.eq.s32.totalorder %s34, 0
      %p239 = por %p237, %p238
      %s241 = sadd.s32 %s240, 1
      %p244 = scmp.eq.s32.totalorder %s28, 1
      %p245 = scmp.ne.s32.totalorder %s240, %s242
      %p246 = scmp.eq.s32.totalorder %s28, 0
      %p247 = por %p245, %p246
      %p248 = scmp.ne.s32.totalorder %s240, %s242
      %p249 = scmp.eq.s32.totalorder %s33, 1
      %p250 = por %p248, %p249
      %p251 = scmp.ne.s32.totalorder %s242, %s243
      %p252 = scmp.eq.s32.totalorder %s33, 0
      %p253 = por %p251, %p252
      %p254 = scmp.ne.s32.totalorder %s242, %s243
      %p255 = scmp.eq.s32.totalorder %s34, 1
      %p256 = por %p254, %p255
      %p258 = scmp.ne.s32.totalorder %s243, %s257
      %p259 = scmp.eq.s32.totalorder %s34, 0
      %p260 = por %p258, %p259
      %s262 = sadd.s32 %s261, 1
      %p265 = scmp.eq.s32.totalorder %s28, 1
      %p266 = scmp.ne.s32.totalorder %s261, %s263
      %p267 = scmp.eq.s32.totalorder %s28, 0
      %p268 = por %p266, %p267
      %p269 = scmp.ne.s32.totalorder %s261, %s263
      %p270 = scmp.eq.s32.totalorder %s33, 1
      %p271 = por %p269, %p270
      %p272 = scmp.ne.s32.totalorder %s263, %s264
      %p273 = scmp.eq.s32.totalorder %s33, 0
      %p274 = por %p272, %p273
      %p275 = scmp.ne.s32.totalorder %s263, %s264
      %p276 = scmp.eq.s32.totalorder %s34, 1
      %p277 = por %p275, %p276
      %p279 = scmp.ne.s32.totalorder %s264, %s278
      %p280 = scmp.eq.s32.totalorder %s34, 0
      %p281 = por %p279, %p280
      %s283 = sadd.s32 %s282, 1
      %p286 = scmp.eq.s32.totalorder %s28, 1
      %p287 = scmp.ne.s32.totalorder %s282, %s284
      %p288 = scmp.eq.s32.totalorder %s28, 0
      %p289 = por %p287, %p288
      %p290 = scmp.ne.s32.totalorder %s282, %s284
      %p291 = scmp.eq.s32.totalorder %s33, 1
      %p292 = por %p290, %p291
      %p293 = scmp.ne.s32.totalorder %s284, %s285
      %p294 = scmp.eq.s32.totalorder %s33, 0
      %p295 = por %p293, %p294
      %p296 = scmp.ne.s32.totalorder %s284, %s285
      %p297 = scmp.eq.s32.totalorder %s34, 1
      %p298 = por %p296, %p297
      %p300 = scmp.ne.s32.totalorder %s285, %s299
      %p301 = scmp.eq.s32.totalorder %s34, 0
      %p302 = por %p300, %p301
      %s303 = ssub.s32 %s35, %s54
      %s304 = ssub.s32 %s36, %s50
      %s305 = sor.u32 %s303, %s304
      %p306 = scmp.eq.s32.totalorder %s305, 0
      %s308 = sadd.s32 %s307, 1
      %s309 = scalar_select %p306, %s307, %s308
      %p312 = pneg %p306
      %p313 = scmp.eq.s32.totalorder %s28, 1
      %p314 = por %p312, %p313
      %p315 = scmp.ne.s32.totalorder %s307, %s310
      %p316 = scmp.eq.s32.totalorder %s28, 0
      %p317 = por %p315, %p316
      %p318 = scmp.ne.s32.totalorder %s307, %s310
      %p319 = scmp.eq.s32.totalorder %s33, 1
      %p320 = por %p318, %p319
      %p321 = scmp.ne.s32.totalorder %s310, %s311
      %p322 = scmp.eq.s32.totalorder %s33, 0
      %p323 = por %p321, %p322
      %p324 = scmp.ne.s32.totalorder %s310, %s311
      %p325 = scmp.eq.s32.totalorder %s34, 1
      %p326 = por %p324, %p325
      %p328 = scmp.ne.s32.totalorder %s311, %s327
      %p329 = scmp.eq.s32.totalorder %s34, 0
      %p330 = por %p328, %p329
      %p331 = scmp.le.s32.totalorder 1, %s28
      %p332 = scmp.lt.s32.totalorder %s28, 3
      %p333 = pnand %p331, %p332
      %p334 = pneg %p333
      // Predicated region
      $region9: #{tpu_custom_call.1} parent=5 // pred_check
        _
      $region10: #{tpu_custom_call.1} parent=5 // pred_check_branch
        %336 = sbr.rel (%p333) target = $region12
      $region11: #{tpu_custom_call.1} parent=5 // pred_region
        %s337 = ssub.s32 %s28, 1
        // Predicated region
        $region13: #{tpu_custom_call.1} parent=11 // pred_check
          %p338 = pneg %p148
        $region14: #{tpu_custom_call.1} parent=11 // pred_check_branch
          %340 = sbr.rel (%p338) target = $region16
        $region15: #{tpu_custom_call.1} parent=11 // pred_region
          %s342 = ssub.s32 256, 256
          %343 = vsyncadd [#allocation10], %s342
          %s344 = sshll.u32 [#allocation9], 4
          %s345 = int_to_ptr.vmem [resolvable:$true] %s344
          %350 = dma.hbm_to_vmem [thread:$0]  %s3, 256, %s345, [#allocation10], 64, 64, 4
        $region16: #{tpu_custom_call.1} parent=11 // pred_fallthru
          _
        // Predicated region
        $region17: #{tpu_custom_call.1} parent=11 // pred_check
          %p351 = pneg %p169
        $region18: #{tpu_custom_call.1} parent=11 // pred_check_branch
          %353 = sbr.rel (%p351) target = $region20
        $region19: #{tpu_custom_call.1} parent=11 // pred_region
          %s355 = ssub.s32 256, 256
          %356 = vsyncadd [#allocation10], %s355
          %s357 = sshll.u32 [#allocation11], 4
          %s358 = int_to_ptr.vmem [resolvable:$true] %s357
          %363 = dma.hbm_to_vmem [thread:$0]  %s4, 256, %s358, [#allocation10], 64, 64, 4
        $region20: #{tpu_custom_call.1} parent=11 // pred_fallthru
          _
        // Predicated region
        $region21: #{tpu_custom_call.1} parent=11 // pred_check
          %p364 = pneg %p190
        $region22: #{tpu_custom_call.1} parent=11 // pred_check_branch
          %366 = sbr.rel (%p364) target = $region24
        $region23: #{tpu_custom_call.1} parent=11 // pred_region
          %s368 = ssub.s32 256, 256
          %369 = vsyncadd [#allocation13], %s368
          %s370 = sshll.u32 [#allocation12], 4
          %s371 = int_to_ptr.vmem [resolvable:$true] %s370
          %376 = dma.hbm_to_vmem [thread:$0]  %s5, 256, %s371, [#allocation13], 64, 64, 4
        $region24: #{tpu_custom_call.1} parent=11 // pred_fallthru
          _
        // Predicated region
        $region25: #{tpu_custom_call.1} parent=11 // pred_check
          %p377 = pneg %p211
        $region26: #{tpu_custom_call.1} parent=11 // pred_check_branch
          %379 = sbr.rel (%p377) target = $region28
        $region27: #{tpu_custom_call.1} parent=11 // pred_region
          %s381 = ssub.s32 256, 256
          %382 = vsyncadd [#allocation13], %s381
          %s383 = sshll.u32 [#allocation14], 4
          %s384 = int_to_ptr.vmem [resolvable:$true] %s383
          %389 = dma.hbm_to_vmem [thread:$0]  %s6, 256, %s384, [#allocation13], 64, 64, 4
        $region28: #{tpu_custom_call.1} parent=11 // pred_fallthru
          _
        // Predicated region
        $region29: #{tpu_custom_call.1} parent=11 // pred_check
          %p390 = pneg %p232
        $region30: #{tpu_custom_call.1} parent=11 // pred_check_branch
          %392 = sbr.rel (%p390) target = $region32
        $region31: #{tpu_custom_call.1} parent=11 // pred_region
          _
        $region32: #{tpu_custom_call.1} parent=11 // pred_fallthru
          _
        // Predicated region
        $region33: #{tpu_custom_call.1} parent=11 // pred_check
          %p393 = pneg %p253
        $region34: #{tpu_custom_call.1} parent=11 // pred_check_branch
          %395 = sbr.rel (%p393) target = $region36
        $region35: #{tpu_custom_call.1} parent=11 // pred_region
          _
        $region36: #{tpu_custom_call.1} parent=11 // pred_fallthru
          _
        // Predicated region
        $region37: #{tpu_custom_call.1} parent=11 // pred_check
          %p396 = pneg %p274
        $region38: #{tpu_custom_call.1} parent=11 // pred_check_branch
          %398 = sbr.rel (%p396) target = $region40
        $region39: #{tpu_custom_call.1} parent=11 // pred_region
          _
        $region40: #{tpu_custom_call.1} parent=11 // pred_fallthru
          _
        // Predicated region
        $region41: #{tpu_custom_call.1} parent=11 // pred_check
          %p399 = pneg %p295
        $region42: #{tpu_custom_call.1} parent=11 // pred_check_branch
          %401 = sbr.rel (%p399) target = $region44
        $region43: #{tpu_custom_call.1} parent=11 // pred_region
          _
        $region44: #{tpu_custom_call.1} parent=11 // pred_fallthru
          _
      $region12: #{tpu_custom_call.1} parent=5 // pred_fallthru
        _
      %p402 = scmp.lt.s32.totalorder %s28, 2
      // Predicated region
      $region45: #{tpu_custom_call.1} parent=5 // pred_check
        %p403 = pneg %p402
      $region46: #{tpu_custom_call.1} parent=5 // pred_check_branch
        %405 = sbr.rel (%p403) target = $region48
      $region47: #{tpu_custom_call.1} parent=5 // pred_region
        // Predicated region
        $region49: #{tpu_custom_call.1} parent=47 // pred_check
          %p406 = pneg %p69
        $region50: #{tpu_custom_call.1} parent=47 // pred_check_branch
          %408 = sbr.rel (%p406) target = $region52
        $region51: #{tpu_custom_call.1} parent=47 // pred_region
          %s409 = sand.u32 %s59, 1
          %s410 = scalar_lea.sflag [#allocation4], %s409
          %s411 = sand.u32 %s59, 1
          %s412 = smul.addr %s411, 4
          %s413 = scalar_lea.vmem [#allocation3], %s412
          %s415 = ssub.s32 64, 64
          %416 = vsyncadd %s410, %s415
          %s417 = sadd.s32 %s36, %s35
          %s418 = smul.addr %s417, 64
          %s419 = scalar_lea.hbm %s0, %s418
          %s421 = sshll.u32 %s413, 4
          %s422 = int_to_ptr.vmem [resolvable:$true] %s421
          %424 = dma.hbm_to_vmem [thread:$0]  %s419, 64, %s422, %s410
        $region52: #{tpu_custom_call.1} parent=47 // pred_fallthru
          _
        // Predicated region
        $region53: #{tpu_custom_call.1} parent=47 // pred_check
          %p425 = pneg %p95
        $region54: #{tpu_custom_call.1} parent=47 // pred_check_branch
          %427 = sbr.rel (%p425) target = $region56
        $region55: #{tpu_custom_call.1} parent=47 // pred_region
          %s428 = sand.u32 %s28, 1
          %s429 = scalar_lea.sflag [#allocation7], %s428
          %s430 = sand.u32 %s85, 1
          %s431 = smul.addr %s430, 4
          %s432 = scalar_lea.vmem [#allocation6], %s431
          %s434 = ssub.s32 64, 64
          %435 = vsyncadd %s429, %s434
          %s436 = smul.addr %s35, 64
          %s437 = scalar_lea.hbm %s1, %s436
          %s439 = sshll.u32 %s432, 4
          %s440 = int_to_ptr.vmem [resolvable:$true] %s439
          %442 = dma.hbm_to_vmem [thread:$0]  %s437, 64, %s440, %s429
        $region56: #{tpu_custom_call.1} parent=47 // pred_fallthru
          _
        // Predicated region
        $region57: #{tpu_custom_call.1} parent=47 // pred_check
          %p443 = pneg %p121
        $region58: #{tpu_custom_call.1} parent=47 // pred_check_branch
          %445 = sbr.rel (%p443) target = $region60
        $region59: #{tpu_custom_call.1} parent=47 // pred_region
          %s446 = sand.u32 %s28, 1
          %s447 = scalar_lea.sflag [#allocation7], %s446
          %s448 = sand.u32 %s111, 1
          %s449 = smul.addr %s448, 4
          %s450 = scalar_lea.vmem [#allocation8], %s449
          %s452 = ssub.s32 64, 64
          %453 = vsyncadd %s447, %s452
          %s454 = smul.addr %s35, 64
          %s455 = scalar_lea.hbm %s2, %s454
          %s457 = sshll.u32 %s450, 4
          %s458 = int_to_ptr.vmem [resolvable:$true] %s457
          %460 = dma.hbm_to_vmem [thread:$0]  %s455, 64, %s458, %s447
        $region60: #{tpu_custom_call.1} parent=47 // pred_fallthru
          _
      $region48: #{tpu_custom_call.1} parent=5 // pred_fallthru
        _
      %p461 = scmp.le.s32.totalorder 1, %s28
      %p462 = scmp.lt.s32.totalorder %s28, 3
      %p463 = pnand %p461, %p462
      %p464 = pneg %p463
      // Predicated region
      $region61: #{tpu_custom_call.1} parent=5 // pred_check
        _
      $region62: #{tpu_custom_call.1} parent=5 // pred_check_branch
        %466 = sbr.rel (%p463) target = $region64
      $region63: #{tpu_custom_call.1} parent=5 // pred_region
        %s467 = ssub.s32 %s28, 1
        %s468 = sand.u32 %s62, 1
        %s469 = scalar_lea.sflag [#allocation4], %s468
        %s470 = sand.u32 %s62, 1
        %s471 = smul.addr %s470, 4
        %s472 = scalar_lea.vmem [#allocation3], %s471
        // Predicated region
        $region65: #{tpu_custom_call.1} parent=63 // pred_check
          %p473 = pneg %p75
        $region66: #{tpu_custom_call.1} parent=63 // pred_check_branch
          %475 = sbr.rel (%p473) target = $region68
        $region67: #{tpu_custom_call.1} parent=63 // pred_region
          %476 = dma.done %s469, 64
        $region68: #{tpu_custom_call.1} parent=63 // pred_fallthru
          _
        %s477 = sand.u32 %s33, 1
        %s478 = scalar_lea.sflag [#allocation7], %s477
        %s479 = sand.u32 %s88, 1
        %s480 = smul.addr %s479, 4
        %s481 = scalar_lea.vmem [#allocation6], %s480
        // Predicated region
        $region69: #{tpu_custom_call.1} parent=63 // pred_check
          %p482 = pneg %p101
        $region70: #{tpu_custom_call.1} parent=63 // pred_check_branch
          %484 = sbr.rel (%p482) target = $region72
        $region71: #{tpu_custom_call.1} parent=63 // pred_region
          %485 = dma.done %s478, 64
        $region72: #{tpu_custom_call.1} parent=63 // pred_fallthru
          _
        %s486 = sand.u32 %s33, 1
        %s487 = scalar_lea.sflag [#allocation7], %s486
        %s488 = sand.u32 %s114, 1
        %s489 = smul.addr %s488, 4
        %s490 = scalar_lea.vmem [#allocation8], %s489
        // Predicated region
        $region73: #{tpu_custom_call.1} parent=63 // pred_check
          %p491 = pneg %p127
        $region74: #{tpu_custom_call.1} parent=63 // pred_check_branch
          %493 = sbr.rel (%p491) target = $region76
        $region75: #{tpu_custom_call.1} parent=63 // pred_region
          %494 = dma.done %s487, 64
        $region76: #{tpu_custom_call.1} parent=63 // pred_fallthru
          _
        // Predicated region
        $region77: #{tpu_custom_call.1} parent=63 // pred_check
          %p495 = pneg %p148
        $region78: #{tpu_custom_call.1} parent=63 // pred_check_branch
          %497 = sbr.rel (%p495) target = $region80
        $region79: #{tpu_custom_call.1} parent=63 // pred_region
          %498 = dma.done [#allocation10], 256
        $region80: #{tpu_custom_call.1} parent=63 // pred_fallthru
          _
        // Predicated region
        $region81: #{tpu_custom_call.1} parent=63 // pred_check
          %p499 = pneg %p169
        $region82: #{tpu_custom_call.1} parent=63 // pred_check_branch
          %501 = sbr.rel (%p499) target = $region84
        $region83: #{tpu_custom_call.1} parent=63 // pred_region
          %502 = dma.done [#allocation10], 256
        $region84: #{tpu_custom_call.1} parent=63 // pred_fallthru
          _
        // Predicated region
        $region85: #{tpu_custom_call.1} parent=63 // pred_check
          %p503 = pneg %p190
        $region86: #{tpu_custom_call.1} parent=63 // pred_check_branch
          %505 = sbr.rel (%p503) target = $region88
        $region87: #{tpu_custom_call.1} parent=63 // pred_region
          %506 = dma.done [#allocation13], 256
        $region88: #{tpu_custom_call.1} parent=63 // pred_fallthru
          _
        // Predicated region
        $region89: #{tpu_custom_call.1} parent=63 // pred_check
          %p507 = pneg %p211
        $region90: #{tpu_custom_call.1} parent=63 // pred_check_branch
          %509 = sbr.rel (%p507) target = $region92
        $region91: #{tpu_custom_call.1} parent=63 // pred_region
          %510 = dma.done [#allocation13], 256
        $region92: #{tpu_custom_call.1} parent=63 // pred_fallthru
          _
        %s511 = sand.u32 %s62, 1
        %s512 = scalar_lea.sflag [#allocation4], %s511
        %s513 = sand.u32 %s62, 1
        %s514 = smul.addr %s513, 4
        %s515 = scalar_lea.vmem [#allocation3], %s514
        %p516 = pneg %p75
        %p517 = pneg %p72
        %s518 = sand.u32 %s33, 1
        %s519 = scalar_lea.sflag [#allocation7], %s518
        %s520 = sand.u32 %s88, 1
        %s521 = smul.addr %s520, 4
        %s522 = scalar_lea.vmem [#allocation6], %s521
        %p523 = pneg %p101
        %p524 = pneg %p98
        %s525 = sand.u32 %s33, 1
        %s526 = scalar_lea.sflag [#allocation7], %s525
        %s527 = sand.u32 %s114, 1
        %s528 = smul.addr %s527, 4
        %s529 = scalar_lea.vmem [#allocation8], %s528
        %p530 = pneg %p127
        %p531 = pneg %p124
        %p532 = pneg %p148
        %p533 = pneg %p145
        %p534 = pneg %p169
        %p535 = pneg %p166
        %p536 = pneg %p190
        %p537 = pneg %p187
        %p538 = pneg %p211
        %p539 = pneg %p208
        %p540 = pneg %p232
        %p541 = pneg %p229
        %p542 = pneg %p253
        %p543 = pneg %p250
        %p544 = pneg %p274
        %p545 = pneg %p271
        %p546 = pneg %p295
        %p547 = pneg %p292
        %p548 = pneg %p323
        %p549 = pneg %p320
        %s550 = sand.u32 %s310, 1
        %s551 = scalar_lea.sflag [#allocation5], %s550
        %s552 = sand.u32 %s310, 1
        %s553 = smul.addr %s552, 8
        %s554 = scalar_lea.vmem [#allocation15], %s553
        %v556 = vld [vmem:[%s472] sm:$0xf]
        %s557 = smul.u32 %s40, 4
        %s558 = smul.addr %s557, 4
        %s559 = scalar_lea.vmem [#allocation9], %s558
        %v560 = vld [vmem:[%s559] sm:$0xf]
        %v561 = vld [vmem:[%s559 + $0x4] sm:$0xf]
        %v562 = vld [vmem:[%s559 + $0x8] sm:$0xf]
        %v563 = vld [vmem:[%s559 + $0xc] sm:$0xf]
        %s564 = scalar_lea.vmem %s7, %s40
        %v565 = vld [vmem:[%s564] sm:$0x1]
        %v567 = vlaneseq
        %v568 = vshrl.u32 %v567, 7
        %v569 = vsub.s32 0, %v568
        %v570 = vrot.slane %v565, %v569
        %v576 = vunpack.c.l.b16 %v560
        %v577 = vunpack.c.l.b16 %v561
        %v578 = vunpack.c.l.b16 %v562
        %v579 = vunpack.c.l.b16 %v563
        %v580 = vpack.c.b16 %v577, %v576
        %v581 = vpack.c.b16 %v579, %v578
        %vm584 = vcmask 261120
        %v586 = vsel %vm584, %v556, 0
        %588 = vmatprep.subr.bf16.mxu0 0
        %589 = vmatpush1.bf16.msra.mxu0 0
        %590 = vmatprep.subr.bf16.mxu0 0
        %591 = vmatpush1.bf16.msra.mxu0 0
        %592 = vmatprep.subr.bf16.mxu0 0
        %593 = vmatpush1.bf16.msra.mxu0 0
        %594 = vmatprep.subr.bf16.mxu0 0
        %595 = vmatpush1.bf16.msra.mxu0 0
        %596 = vmatprep.subr.bf16.mxu0 0
        %597 = vmatpush1.bf16.msra.mxu0 0
        %598 = vmatprep.subr.bf16.mxu0 0
        %599 = vmatpush1.bf16.msra.mxu0 0
        %600 = vmatprep.subr.bf16.mxu0 0
        %601 = vmatpush1.bf16.msra.mxu0 %v581
        %602 = vmatprep.subr.bf16.mxu0 0
        %603 = vmatpush1.bf16.msra.mxu0 %v580
        %604 = vmatprep.subr.bf16.mxu0 0
        %605 = vmatpush2.bf16.msra.mxu0 0
        %606 = vmatprep.subr.bf16.mxu0 0
        %607 = vmatpush2.bf16.msra.mxu0 0
        %608 = vmatprep.subr.bf16.mxu0 0
        %609 = vmatpush2.bf16.msra.mxu0 0
        %610 = vmatprep.subr.bf16.mxu0 0
        %611 = vmatpush2.bf16.msra.mxu0 0
        %612 = vmatprep.subr.bf16.mxu0 0
        %613 = vmatpush2.bf16.msra.mxu0 0
        %614 = vmatprep.subr.bf16.mxu0 0
        %615 = vmatpush2.bf16.msra.mxu0 0
        %616 = vmatprep.subr.bf16.mxu0 0
        %617 = vmatpush2.bf16.msra.mxu0 0
        %618 = vmatprep.subr.bf16.mxu0 0
        %619 = vmatpush2.bf16.msra.mxu0 0
        %620 = vmatprep.mubr.bf16.mxu0 0
        %621 = vmatmul.mubr.bf16.gmra.mxu0 %v586
        %v622 = vpop.f32.mrf.mxu0
        %v623 = vadd.f32 %v570, %v622
        %v624 = vpop.f32.mrf.mxu0
        %v625 = vpop.f32.mrf.mxu0
        %v626 = vpop.f32.mrf.mxu0
        %627 = vdwg.mxu0
        %v628 = vld [vmem:[%s481] sm:$0xf]
        %s629 = smul.addr %s557, 4
        %s630 = scalar_lea.vmem [#allocation11], %s629
        %v631 = vld [vmem:[%s630] sm:$0xf]
        %v632 = vld [vmem:[%s630 + $0x4] sm:$0xf]
        %v633 = vld [vmem:[%s630 + $0x8] sm:$0xf]
        %v634 = vld [vmem:[%s630 + $0xc] sm:$0xf]
        %s635 = scalar_lea.vmem %s8, %s40
        %v636 = vld [vmem:[%s635] sm:$0x1]
        %v638 = vlaneseq
        %v639 = vshrl.u32 %v638, 7
        %v640 = vsub.s32 0, %v639
        %v641 = vrot.slane %v636, %v640
        %v647 = vunpack.c.l.b16 %v631
        %v648 = vunpack.c.l.b16 %v632
        %v649 = vunpack.c.l.b16 %v633
        %v650 = vunpack.c.l.b16 %v634
        %v651 = vpack.c.b16 %v648, %v647
        %v652 = vpack.c.b16 %v650, %v649
        %v656 = vsel %vm584, %v628, 0
        %658 = vmatprep.subr.bf16.mxu0 0
        %659 = vmatpush1.bf16.msra.mxu0 0
        %660 = vmatprep.subr.bf16.mxu0 0
        %661 = vmatpush1.bf16.msra.mxu0 0
        %662 = vmatprep.subr.bf16.mxu0 0
        %663 = vmatpush1.bf16.msra.mxu0 0
        %664 = vmatprep.subr.bf16.mxu0 0
        %665 = vmatpush1.bf16.msra.mxu0 0
        %666 = vmatprep.subr.bf16.mxu0 0
        %667 = vmatpush1.bf16.msra.mxu0 0
        %668 = vmatprep.subr.bf16.mxu0 0
        %669 = vmatpush1.bf16.msra.mxu0 0
        %670 = vmatprep.subr.bf16.mxu0 0
        %671 = vmatpush1.bf16.msra.mxu0 %v652
        %672 = vmatprep.subr.bf16.mxu0 0
        %673 = vmatpush1.bf16.msra.mxu0 %v651
        %674 = vmatprep.subr.bf16.mxu0 0
        %675 = vmatpush2.bf16.msra.mxu0 0
        %676 = vmatprep.subr.bf16.mxu0 0
        %677 = vmatpush2.bf16.msra.mxu0 0
        %678 = vmatprep.subr.bf16.mxu0 0
        %679 = vmatpush2.bf16.msra.mxu0 0
        %680 = vmatprep.subr.bf16.mxu0 0
        %681 = vmatpush2.bf16.msra.mxu0 0
        %682 = vmatprep.subr.bf16.mxu0 0
        %683 = vmatpush2.bf16.msra.mxu0 0
        %684 = vmatprep.subr.bf16.mxu0 0
        %685 = vmatpush2.bf16.msra.mxu0 0
        %686 = vmatprep.subr.bf16.mxu0 0
        %687 = vmatpush2.bf16.msra.mxu0 0
        %688 = vmatprep.subr.bf16.mxu0 0
        %689 = vmatpush2.bf16.msra.mxu0 0
        %690 = vmatprep.mubr.bf16.mxu0 0
        %691 = vmatmul.mubr.bf16.gmra.mxu0 %v656
        %v692 = vpop.f32.mrf.mxu0
        %v693 = vadd.f32 %v641, %v692
        %v694 = vpop.f32.mrf.mxu0
        %v695 = vpop.f32.mrf.mxu0
        %v696 = vpop.f32.mrf.mxu0
        %697 = vdwg.mxu0
        %v698 = vld [vmem:[%s490] sm:$0xf]
        %s699 = smul.addr %s557, 4
        %s700 = scalar_lea.vmem [#allocation12], %s699
        %v701 = vld [vmem:[%s700] sm:$0xf]
        %v702 = vld [vmem:[%s700 + $0x4] sm:$0xf]
        %v703 = vld [vmem:[%s700 + $0x8] sm:$0xf]
        %v704 = vld [vmem:[%s700 + $0xc] sm:$0xf]
        %s705 = scalar_lea.vmem %s9, %s40
        %v706 = vld [vmem:[%s705] sm:$0x1]
        %v708 = vlaneseq
        %v709 = vshrl.u32 %v708, 7
        %v710 = vsub.s32 0, %v709
        %v711 = vrot.slane %v706, %v710
        %v717 = vunpack.c.l.b16 %v701
        %v718 = vunpack.c.l.b16 %v702
        %v719 = vunpack.c.l.b16 %v703
        %v720 = vunpack.c.l.b16 %v704
        %v721 = vpack.c.b16 %v718, %v717
        %v722 = vpack.c.b16 %v720, %v719
        %v726 = vsel %vm584, %v698, 0
        %728 = vmatprep.subr.bf16.mxu0 0
        %729 = vmatpush1.bf16.msra.mxu0 0
        %730 = vmatprep.subr.bf16.mxu0 0
        %731 = vmatpush1.bf16.msra.mxu0 0
        %732 = vmatprep.subr.bf16.mxu0 0
        %733 = vmatpush1.bf16.msra.mxu0 0
        %734 = vmatprep.subr.bf16.mxu0 0
        %735 = vmatpush1.bf16.msra.mxu0 0
        %736 = vmatprep.subr.bf16.mxu0 0
        %737 = vmatpush1.bf16.msra.mxu0 0
        %738 = vmatprep.subr.bf16.mxu0 0
        %739 = vmatpush1.bf16.msra.mxu0 0
        %740 = vmatprep.subr.bf16.mxu0 0
        %741 = vmatpush1.bf16.msra.mxu0 %v722
        %742 = vmatprep.subr.bf16.mxu0 0
        %743 = vmatpush1.bf16.msra.mxu0 %v721
        %744 = vmatprep.subr.bf16.mxu0 0
        %745 = vmatpush2.bf16.msra.mxu0 0
        %746 = vmatprep.subr.bf16.mxu0 0
        %747 = vmatpush2.bf16.msra.mxu0 0
        %748 = vmatprep.subr.bf16.mxu0 0
        %749 = vmatpush2.bf16.msra.mxu0 0
        %750 = vmatprep.subr.bf16.mxu0 0
        %751 = vmatpush2.bf16.msra.mxu0 0
        %752 = vmatprep.subr.bf16.mxu0 0
        %753 = vmatpush2.bf16.msra.mxu0 0
        %754 = vmatprep.subr.bf16.mxu0 0
        %755 = vmatpush2.bf16.msra.mxu0 0
        %756 = vmatprep.subr.bf16.mxu0 0
        %757 = vmatpush2.bf16.msra.mxu0 0
        %758 = vmatprep.subr.bf16.mxu0 0
        %759 = vmatpush2.bf16.msra.mxu0 0
        %760 = vmatprep.mubr.bf16.mxu0 0
        %761 = vmatmul.mubr.bf16.gmra.mxu0 %v726
        %v762 = vpop.f32.mrf.mxu0
        %v763 = vadd.f32 %v711, %v762
        %v764 = vpop.f32.mrf.mxu0
        %v765 = vpop.f32.mrf.mxu0
        %v766 = vpop.f32.mrf.mxu0
        %767 = vdwg.mxu0
        %v768 = vpack.c.bf16 %v623, %v623
        %v769 = vpack.c.bf16 %v693, %v693
        %v770 = vpack.c.bf16 %v763, %v763
        %vm771 = vcmask 64512
        %v773 = vsel %vm771, %v768, 0
        %v776 = vsel %vm771, %v769, 0
        %778 = vmatprep.subr.bf16.mxu0 0
        %779 = vmatpush1.bf16.xpose.msra.mxu0 0
        %780 = vmatprep.subr.bf16.mxu0 0
        %781 = vmatpush1.bf16.xpose.msra.mxu0 0
        %782 = vmatprep.subr.bf16.mxu0 0
        %783 = vmatpush1.bf16.xpose.msra.mxu0 0
        %784 = vmatprep.subr.bf16.mxu0 0
        %785 = vmatpush1.bf16.xpose.msra.mxu0 0
        %786 = vmatprep.subr.bf16.mxu0 0
        %787 = vmatpush1.bf16.xpose.msra.mxu0 0
        %788 = vmatprep.subr.bf16.mxu0 0
        %789 = vmatpush1.bf16.xpose.msra.mxu0 0
        %790 = vmatprep.subr.bf16.mxu0 0
        %791 = vmatpush1.bf16.xpose.msra.mxu0 0
        %792 = vmatprep.subr.bf16.mxu0 0
        %793 = vmatpush1.bf16.xpose.msra.mxu0 %v776
        %794 = vmatprep.subr.bf16.mxu0 0
        %795 = vmatpush2.bf16.xpose.msra.mxu0 0
        %796 = vmatprep.subr.bf16.mxu0 0
        %797 = vmatpush2.bf16.xpose.msra.mxu0 0
        %798 = vmatprep.subr.bf16.mxu0 0
        %799 = vmatpush2.bf16.xpose.msra.mxu0 0
        %800 = vmatprep.subr.bf16.mxu0 0
        %801 = vmatpush2.bf16.xpose.msra.mxu0 0
        %802 = vmatprep.subr.bf16.mxu0 0
        %803 = vmatpush2.bf16.xpose.msra.mxu0 0
        %804 = vmatprep.subr.bf16.mxu0 0
        %805 = vmatpush2.bf16.xpose.msra.mxu0 0
        %806 = vmatprep.subr.bf16.mxu0 0
        %807 = vmatpush2.bf16.xpose.msra.mxu0 0
        %808 = vmatprep.subr.bf16.mxu0 0
        %809 = vmatpush2.bf16.xpose.msra.mxu0 0
        %810 = vmatprep.mubr.bf16.mxu0 0
        %811 = vmatmul.mubr.bf16.gmra.mxu0 %v773
        %v812 = vpop.f32.mrf.mxu0
        %v813 = vadd.f32 0.0, %v812
        %v814 = vpop.f32.mrf.mxu0
        %v815 = vpop.f32.mrf.mxu0
        %v816 = vpop.f32.mrf.mxu0
        %817 = vdwg.mxu0
        %v818 = vsel %vm771, %v813, -inf
        %819 = vmax.xlane.f32.xlu0 %v818
        %v820 = vpop.xlane.xlu0 %819
        %v821 = vsub.f32 %v813, %v820
        %v822 = vmul.f32 %v821, 1.442695
        %v823 = vpow.pop %v822
        %v824 = vsel %vm771, %v823, 0.0
        %825 = vadd.xlane.f32.xlu0 %v824
        %v826 = vpop.xlane.xlu0 %825
        %v827 = vrcp.pop %v826
        %v828 = vmul.f32 %v823, %v827
        %v829 = vpack.c.bf16 %v828, %v828
        %v831 = vsel %vm771, %v829, 0
        %vm833 = vcmask 1043456
        %v835 = vsel %vm833, %v770, 0
        %837 = vmatprep.subr.bf16.mxu0 0
        %838 = vmatpush1.bf16.msra.mxu0 0
        %839 = vmatprep.subr.bf16.mxu0 0
        %840 = vmatpush1.bf16.msra.mxu0 0
        %841 = vmatprep.subr.bf16.mxu0 0
        %842 = vmatpush1.bf16.msra.mxu0 0
        %843 = vmatprep.subr.bf16.mxu0 0
        %844 = vmatpush1.bf16.msra.mxu0 0
        %845 = vmatprep.subr.bf16.mxu0 0
        %846 = vmatpush1.bf16.msra.mxu0 0
        %847 = vmatprep.subr.bf16.mxu0 0
        %848 = vmatpush1.bf16.msra.mxu0 0
        %849 = vmatprep.subr.bf16.mxu0 0
        %850 = vmatpush1.bf16.msra.mxu0 0
        %851 = vmatprep.subr.bf16.mxu0 0
        %852 = vmatpush1.bf16.msra.mxu0 %v835
        %853 = vmatprep.subr.bf16.mxu0 0
        %854 = vmatpush2.bf16.msra.mxu0 0
        %855 = vmatprep.subr.bf16.mxu0 0
        %856 = vmatpush2.bf16.msra.mxu0 0
        %857 = vmatprep.subr.bf16.mxu0 0
        %858 = vmatpush2.bf16.msra.mxu0 0
        %859 = vmatprep.subr.bf16.mxu0 0
        %860 = vmatpush2.bf16.msra.mxu0 0
        %861 = vmatprep.subr.bf16.mxu0 0
        %862 = vmatpush2.bf16.msra.mxu0 0
        %863 = vmatprep.subr.bf16.mxu0 0
        %864 = vmatpush2.bf16.msra.mxu0 0
        %865 = vmatprep.subr.bf16.mxu0 0
        %866 = vmatpush2.bf16.msra.mxu0 0
        %867 = vmatprep.subr.bf16.mxu0 0
        %868 = vmatpush2.bf16.msra.mxu0 0
        %869 = vmatprep.mubr.bf16.mxu0 0
        %870 = vmatmul.mubr.bf16.gmra.mxu0 %v831
        %v871 = vpop.f32.mrf.mxu0
        %v872 = vadd.f32 0.0, %v871
        %v873 = vpop.f32.mrf.mxu0
        %v874 = vpop.f32.mrf.mxu0
        %v875 = vpop.f32.mrf.mxu0
        %876 = vdwg.mxu0
        %v877 = vpack.c.bf16 %v872, %v872
        %879 = vrot.lane.b32.xlu0 %v768, 120
        %v880 = vpop.permute.xlu0 %879
        %882 = vrot.lane.b32.xlu0 %v769, 120
        %v883 = vpop.permute.xlu0 %882
        %v885 = vsel %vm771, %v880, 0
        %v888 = vsel %vm771, %v883, 0
        %890 = vmatprep.subr.bf16.mxu0 0
        %891 = vmatpush1.bf16.xpose.msra.mxu0 0
        %892 = vmatprep.subr.bf16.mxu0 0
        %893 = vmatpush1.bf16.xpose.msra.mxu0 0
        %894 = vmatprep.subr.bf16.mxu0 0
        %895 = vmatpush1.bf16.xpose.msra.mxu0 0
        %896 = vmatprep.subr.bf16.mxu0 0
        %897 = vmatpush1.bf16.xpose.msra.mxu0 0
        %898 = vmatprep.subr.bf16.mxu0 0
        %899 = vmatpush1.bf16.xpose.msra.mxu0 0
        %900 = vmatprep.subr.bf16.mxu0 0
        %901 = vmatpush1.bf16.xpose.msra.mxu0 0
        %902 = vmatprep.subr.bf16.mxu0 0
        %903 = vmatpush1.bf16.xpose.msra.mxu0 0
        %904 = vmatprep.subr.bf16.mxu0 0
        %905 = vmatpush1.bf16.xpose.msra.mxu0 %v888
        %906 = vmatprep.subr.bf16.mxu0 0
        %907 = vmatpush2.bf16.xpose.msra.mxu0 0
        %908 = vmatprep.subr.bf16.mxu0 0
        %909 = vmatpush2.bf16.xpose.msra.mxu0 0
        %910 = vmatprep.subr.bf16.mxu0 0
        %911 = vmatpush2.bf16.xpose.msra.mxu0 0
        %912 = vmatprep.subr.bf16.mxu0 0
        %913 = vmatpush2.bf16.xpose.msra.mxu0 0
        %914 = vmatprep.subr.bf16.mxu0 0
        %915 = vmatpush2.bf16.xpose.msra.mxu0 0
        %916 = vmatprep.subr.bf16.mxu0 0
        %917 = vmatpush2.bf16.xpose.msra.mxu0 0
        %918 = vmatprep.subr.bf16.mxu0 0
        %919 = vmatpush2.bf16.xpose.msra.mxu0 0
        %920 = vmatprep.subr.bf16.mxu0 0
        %921 = vmatpush2.bf16.xpose.msra.mxu0 0
        %922 = vmatprep.mubr.bf16.mxu0 0
        %923 = vmatmul.mubr.bf16.gmra.mxu0 %v885
        %v924 = vpop.f32.mrf.mxu0
        %v925 = vadd.f32 0.0, %v924
        %v926 = vpop.f32.mrf.mxu0
        %v927 = vpop.f32.mrf.mxu0
        %v928 = vpop.f32.mrf.mxu0
        %929 = vdwg.mxu0
        %v930 = vsel %vm771, %v925, -inf
        %931 = vmax.xlane.f32.xlu0 %v930
        %v932 = vpop.xlane.xlu0 %931
        %v933 = vsub.f32 %v925, %v932
        %v934 = vmul.f32 %v933, 1.442695
        %v935 = vpow.pop %v934
        %v936 = vsel %vm771, %v935, 0.0
        %937 = vadd.xlane.f32.xlu0 %v936
        %v938 = vpop.xlane.xlu0 %937
        %v939 = vrcp.pop %v938
        %v940 = vmul.f32 %v935, %v939
        %v941 = vpack.c.bf16 %v940, %v940
        %943 = vrot.lane.b32.xlu0 %v770, 120
        %v944 = vpop.permute.xlu0 %943
        %v946 = vsel %vm771, %v941, 0
        %v949 = vsel %vm833, %v944, 0
        %951 = vmatprep.subr.bf16.mxu0 0
        %952 = vmatpush1.bf16.msra.mxu0 0
        %953 = vmatprep.subr.bf16.mxu0 0
        %954 = vmatpush1.bf16.msra.mxu0 0
        %955 = vmatprep.subr.bf16.mxu0 0
        %956 = vmatpush1.bf16.msra.mxu0 0
        %957 = vmatprep.subr.bf16.mxu0 0
        %958 = vmatpush1.bf16.msra.mxu0 0
        %959 = vmatprep.subr.bf16.mxu0 0
        %960 = vmatpush1.bf16.msra.mxu0 0
        %961 = vmatprep.subr.bf16.mxu0 0
        %962 = vmatpush1.bf16.msra.mxu0 0
        %963 = vmatprep.subr.bf16.mxu0 0
        %964 = vmatpush1.bf16.msra.mxu0 0
        %965 = vmatprep.subr.bf16.mxu0 0
        %966 = vmatpush1.bf16.msra.mxu0 %v949
        %967 = vmatprep.subr.bf16.mxu0 0
        %968 = vmatpush2.bf16.msra.mxu0 0
        %969 = vmatprep.subr.bf16.mxu0 0
        %970 = vmatpush2.bf16.msra.mxu0 0
        %971 = vmatprep.subr.bf16.mxu0 0
        %972 = vmatpush2.bf16.msra.mxu0 0
        %973 = vmatprep.subr.bf16.mxu0 0
        %974 = vmatpush2.bf16.msra.mxu0 0
        %975 = vmatprep.subr.bf16.mxu0 0
        %976 = vmatpush2.bf16.msra.mxu0 0
        %977 = vmatprep.subr.bf16.mxu0 0
        %978 = vmatpush2.bf16.msra.mxu0 0
        %979 = vmatprep.subr.bf16.mxu0 0
        %980 = vmatpush2.bf16.msra.mxu0 0
        %981 = vmatprep.subr.bf16.mxu0 0
        %982 = vmatpush2.bf16.msra.mxu0 0
        %983 = vmatprep.mubr.bf16.mxu0 0
        %984 = vmatmul.mubr.bf16.gmra.mxu0 %v946
        %v985 = vpop.f32.mrf.mxu0
        %v986 = vadd.f32 0.0, %v985
        %v987 = vpop.f32.mrf.mxu0
        %v988 = vpop.f32.mrf.mxu0
        %v989 = vpop.f32.mrf.mxu0
        %990 = vdwg.mxu0
        %v991 = vpack.c.bf16 %v986, %v986
        %992 = vrot.lane.b32.xlu0 %v768, 112
        %v993 = vpop.permute.xlu0 %992
        %994 = vrot.lane.b32.xlu0 %v769, 112
        %v995 = vpop.permute.xlu0 %994
        %v997 = vsel %vm771, %v993, 0
        %v1000 = vsel %vm771, %v995, 0
        %1002 = vmatprep.subr.bf16.mxu0 0
        %1003 = vmatpush1.bf16.xpose.msra.mxu0 0
        %1004 = vmatprep.subr.bf16.mxu0 0
        %1005 = vmatpush1.bf16.xpose.msra.mxu0 0
        %1006 = vmatprep.subr.bf16.mxu0 0
        %1007 = vmatpush1.bf16.xpose.msra.mxu0 0
        %1008 = vmatprep.subr.bf16.mxu0 0
        %1009 = vmatpush1.bf16.xpose.msra.mxu0 0
        %1010 = vmatprep.subr.bf16.mxu0 0
        %1011 = vmatpush1.bf16.xpose.msra.mxu0 0
        %1012 = vmatprep.subr.bf16.mxu0 0
        %1013 = vmatpush1.bf16.xpose.msra.mxu0 0
        %1014 = vmatprep.subr.bf16.mxu0 0
        %1015 = vmatpush1.bf16.xpose.msra.mxu0 0
        %1016 = vmatprep.subr.bf16.mxu0 0
        %1017 = vmatpush1.bf16.xpose.msra.mxu0 %v1000
        %1018 = vmatprep.subr.bf16.mxu0 0
        %1019 = vmatpush2.bf16.xpose.msra.mxu0 0
        %1020 = vmatprep.subr.bf16.mxu0 0
        %1021 = vmatpush2.bf16.xpose.msra.mxu0 0
        %1022 = vmatprep.subr.bf16.mxu0 0
        %1023 = vmatpush2.bf16.xpose.msra.mxu0 0
        %1024 = vmatprep.subr.bf16.mxu0 0
        %1025 = vmatpush2.bf16.xpose.msra.mxu0 0
        %1026 = vmatprep.subr.bf16.mxu0 0
        %1027 = vmatpush2.bf16.xpose.msra.mxu0 0
        %1028 = vmatprep.subr.bf16.mxu0 0
        %1029 = vmatpush2.bf16.xpose.msra.mxu0 0
        %1030 = vmatprep.subr.bf16.mxu0 0
        %1031 = vmatpush2.bf16.xpose.msra.mxu0 0
        %1032 = vmatprep.subr.bf16.mxu0 0
        %1033 = vmatpush2.bf16.xpose.msra.mxu0 0
        %1034 = vmatprep.mubr.bf16.mxu0 0
        %1035 = vmatmul.mubr.bf16.gmra.mxu0 %v997
        %v1036 = vpop.f32.mrf.mxu0
        %v1037 = vadd.f32 0.0, %v1036
        %v1038 = vpop.f32.mrf.mxu0
        %v1039 = vpop.f32.mrf.mxu0
        %v1040 = vpop.f32.mrf.mxu0
        %1041 = vdwg.mxu0
        %v1042 = vsel %vm771, %v1037, -inf
        %1043 = vmax.xlane.f32.xlu0 %v1042
        %v1044 = vpop.xlane.xlu0 %1043
        %v1045 = vsub.f32 %v1037, %v1044
        %v1046 = vmul.f32 %v1045, 1.442695
        %v1047 = vpow.pop %v1046
        %v1048 = vsel %vm771, %v1047, 0.0
        %1049 = vadd.xlane.f32.xlu0 %v1048
        %v1050 = vpop.xlane.xlu0 %1049
        %v1051 = vrcp.pop %v1050
        %v1052 = vmul.f32 %v1047, %v1051
        %v1053 = vpack.c.bf16 %v1052, %v1052
        %1054 = vrot.lane.b32.xlu0 %v770, 112
        %v1055 = vpop.permute.xlu0 %1054
        %v1057 = vsel %vm771, %v1053, 0
        %v1060 = vsel %vm833, %v1055, 0
        %1062 = vmatprep.subr.bf16.mxu0 0
        %1063 = vmatpush1.bf16.msra.mxu0 0
        %1064 = vmatprep.subr.bf16.mxu0 0
        %1065 = vmatpush1.bf16.msra.mxu0 0
        %1066 = vmatprep.subr.bf16.mxu0 0
        %1067 = vmatpush1.bf16.msra.mxu0 0
        %1068 = vmatprep.subr.bf16.mxu0 0
        %1069 = vmatpush1.bf16.msra.mxu0 0
        %1070 = vmatprep.subr.bf16.mxu0 0
        %1071 = vmatpush1.bf16.msra.mxu0 0
        %1072 = vmatprep.subr.bf16.mxu0 0
        %1073 = vmatpush1.bf16.msra.mxu0 0
        %1074 = vmatprep.subr.bf16.mxu0 0
        %1075 = vmatpush1.bf16.msra.mxu0 0
        %1076 = vmatprep.subr.bf16.mxu0 0
        %1077 = vmatpush1.bf16.msra.mxu0 %v1060
        %1078 = vmatprep.subr.bf16.mxu0 0
        %1079 = vmatpush2.bf16.msra.mxu0 0
        %1080 = vmatprep.subr.bf16.mxu0 0
        %1081 = vmatpush2.bf16.msra.mxu0 0
        %1082 = vmatprep.subr.bf16.mxu0 0
        %1083 = vmatpush2.bf16.msra.mxu0 0
        %1084 = vmatprep.subr.bf16.mxu0 0
        %1085 = vmatpush2.bf16.msra.mxu0 0
        %1086 = vmatprep.subr.bf16.mxu0 0
        %1087 = vmatpush2.bf16.msra.mxu0 0
        %1088 = vmatprep.subr.bf16.mxu0 0
        %1089 = vmatpush2.bf16.msra.mxu0 0
        %1090 = vmatprep.subr.bf16.mxu0 0
        %1091 = vmatpush2.bf16.msra.mxu0 0
        %1092 = vmatprep.subr.bf16.mxu0 0
        %1093 = vmatpush2.bf16.msra.mxu0 0
        %1094 = vmatprep.mubr.bf16.mxu0 0
        %1095 = vmatmul.mubr.bf16.gmra.mxu0 %v1057
        %v1096 = vpop.f32.mrf.mxu0
        %v1097 = vadd.f32 0.0, %v1096
        %v1098 = vpop.f32.mrf.mxu0
        %v1099 = vpop.f32.mrf.mxu0
        %v1100 = vpop.f32.mrf.mxu0
        %1101 = vdwg.mxu0
        %v1102 = vpack.c.bf16 %v1097, %v1097
        %1103 = vrot.lane.b32.xlu0 %v768, 104
        %v1104 = vpop.permute.xlu0 %1103
        %1105 = vrot.lane.b32.xlu0 %v769, 104
        %v1106 = vpop.permute.xlu0 %1105
        %v1108 = vsel %vm771, %v1104, 0
        %v1111 = vsel %vm771, %v1106, 0
        %1113 = vmatprep.subr.bf16.mxu0 0
        %1114 = vmatpush1.bf16.xpose.msra.mxu0 0
        %1115 = vmatprep.subr.bf16.mxu0 0
        %1116 = vmatpush1.bf16.xpose.msra.mxu0 0
        %1117 = vmatprep.subr.bf16.mxu0 0
        %1118 = vmatpush1.bf16.xpose.msra.mxu0 0
        %1119 = vmatprep.subr.bf16.mxu0 0
        %1120 = vmatpush1.bf16.xpose.msra.mxu0 0
        %1121 = vmatprep.subr.bf16.mxu0 0
        %1122 = vmatpush1.bf16.xpose.msra.mxu0 0
        %1123 = vmatprep.subr.bf16.mxu0 0
        %1124 = vmatpush1.bf16.xpose.msra.mxu0 0
        %1125 = vmatprep.subr.bf16.mxu0 0
        %1126 = vmatpush1.bf16.xpose.msra.mxu0 0
        %1127 = vmatprep.subr.bf16.mxu0 0
        %1128 = vmatpush1.bf16.xpose.msra.mxu0 %v1111
        %1129 = vmatprep.subr.bf16.mxu0 0
        %1130 = vmatpush2.bf16.xpose.msra.mxu0 0
        %1131 = vmatprep.subr.bf16.mxu0 0
        %1132 = vmatpush2.bf16.xpose.msra.mxu0 0
        %1133 = vmatprep.subr.bf16.mxu0 0
        %1134 = vmatpush2.bf16.xpose.msra.mxu0 0
        %1135 = vmatprep.subr.bf16.mxu0 0
        %1136 = vmatpush2.bf16.xpose.msra.mxu0 0
        %1137 = vmatprep.subr.bf16.mxu0 0
        %1138 = vmatpush2.bf16.xpose.msra.mxu0 0
        %1139 = vmatprep.subr.bf16.mxu0 0
        %1140 = vmatpush2.bf16.xpose.msra.mxu0 0
        %1141 = vmatprep.subr.bf16.mxu0 0
        %1142 = vmatpush2.bf16.xpose.msra.mxu0 0
        %1143 = vmatprep.subr.bf16.mxu0 0
        %1144 = vmatpush2.bf16.xpose.msra.mxu0 0
        %1145 = vmatprep.mubr.bf16.mxu0 0
        %1146 = vmatmul.mubr.bf16.gmra.mxu0 %v1108
        %v1147 = vpop.f32.mrf.mxu0
        %v1148 = vadd.f32 0.0, %v1147
        %v1149 = vpop.f32.mrf.mxu0
        %v1150 = vpop.f32.mrf.mxu0
        %v1151 = vpop.f32.mrf.mxu0
        %1152 = vdwg.mxu0
        %v1153 = vsel %vm771, %v1148, -inf
        %1154 = vmax.xlane.f32.xlu0 %v1153
        %v1155 = vpop.xlane.xlu0 %1154
        %v1156 = vsub.f32 %v1148, %v1155
        %v1157 = vmul.f32 %v1156, 1.442695
        %v1158 = vpow.pop %v1157
        %v1159 = vsel %vm771, %v1158, 0.0
        %1160 = vadd.xlane.f32.xlu0 %v1159
        %v1161 = vpop.xlane.xlu0 %1160
        %v1162 = vrcp.pop %v1161
        %v1163 = vmul.f32 %v1158, %v1162
        %v1164 = vpack.c.bf16 %v1163, %v1163
        %1165 = vrot.lane.b32.xlu0 %v770, 104
        %v1166 = vpop.permute.xlu0 %1165
        %v1168 = vsel %vm771, %v1164, 0
        %v1171 = vsel %vm833, %v1166, 0
        %1173 = vmatprep.subr.bf16.mxu0 0
        %1174 = vmatpush1.bf16.msra.mxu0 0
        %1175 = vmatprep.subr.bf16.mxu0 0
        %1176 = vmatpush1.bf16.msra.mxu0 0
        %1177 = vmatprep.subr.bf16.mxu0 0
        %1178 = vmatpush1.bf16.msra.mxu0 0
        %1179 = vmatprep.subr.bf16.mxu0 0
        %1180 = vmatpush1.bf16.msra.mxu0 0
        %1181 = vmatprep.subr.bf16.mxu0 0
        %1182 = vmatpush1.bf16.msra.mxu0 0
        %1183 = vmatprep.subr.bf16.mxu0 0
        %1184 = vmatpush1.bf16.msra.mxu0 0
        %1185 = vmatprep.subr.bf16.mxu0 0
        %1186 = vmatpush1.bf16.msra.mxu0 0
        %1187 = vmatprep.subr.bf16.mxu0 0
        %1188 = vmatpush1.bf16.msra.mxu0 %v1171
        %1189 = vmatprep.subr.bf16.mxu0 0
        %1190 = vmatpush2.bf16.msra.mxu0 0
        %1191 = vmatprep.subr.bf16.mxu0 0
        %1192 = vmatpush2.bf16.msra.mxu0 0
        %1193 = vmatprep.subr.bf16.mxu0 0
        %1194 = vmatpush2.bf16.msra.mxu0 0
        %1195 = vmatprep.subr.bf16.mxu0 0
        %1196 = vmatpush2.bf16.msra.mxu0 0
        %1197 = vmatprep.subr.bf16.mxu0 0
        %1198 = vmatpush2.bf16.msra.mxu0 0
        %1199 = vmatprep.subr.bf16.mxu0 0
        %1200 = vmatpush2.bf16.msra.mxu0 0
        %1201 = vmatprep.subr.bf16.mxu0 0
        %1202 = vmatpush2.bf16.msra.mxu0 0
        %1203 = vmatprep.subr.bf16.mxu0 0
        %1204 = vmatpush2.bf16.msra.mxu0 0
        %1205 = vmatprep.mubr.bf16.mxu0 0
        %1206 = vmatmul.mubr.bf16.gmra.mxu0 %v1168
        %v1207 = vpop.f32.mrf.mxu0
        %v1208 = vadd.f32 0.0, %v1207
        %v1209 = vpop.f32.mrf.mxu0
        %v1210 = vpop.f32.mrf.mxu0
        %v1211 = vpop.f32.mrf.mxu0
        %1212 = vdwg.mxu0
        %v1213 = vpack.c.bf16 %v1208, %v1208
        %1215 = vrot.lane.b32.xlu0 %v991, 8
        %v1216 = vpop.permute.xlu0 %1215
        %1218 = vrot.lane.b32.xlu0 %v1102, 16
        %v1219 = vpop.permute.xlu0 %1218
        %1221 = vrot.lane.b32.xlu0 %v1213, 24
        %v1222 = vpop.permute.xlu0 %1221
        %v1225 = vsel %vm771, %v877, %v1216
        %vm1226 = vcmask 130048
        %v1228 = vsel %vm1226, %v1225, %v1219
        %vm1229 = vcmask 195584
        %v1231 = vsel %vm1229, %v1228, %v1222
        %s1232 = smul.addr %s557, 4
        %s1233 = scalar_lea.vmem [#allocation14], %s1232
        %v1234 = vld [vmem:[%s1233] sm:$0xf]
        %v1235 = vld [vmem:[%s1233 + $0x4] sm:$0xf]
        %v1236 = vld [vmem:[%s1233 + $0x8] sm:$0xf]
        %v1237 = vld [vmem:[%s1233 + $0xc] sm:$0xf]
        %v1242 = vunpack.c.l.b16 %v1234
        %v1243 = vunpack.c.l.b16 %v1235
        %v1244 = vunpack.c.l.b16 %v1236
        %v1245 = vunpack.c.l.b16 %v1237
        %v1246 = vpack.c.b16 %v1243, %v1242
        %v1247 = vpack.c.b16 %v1245, %v1244
        %v1250 = vsel %vm584, %v1231, 0
        %1252 = vmatprep.subr.bf16.mxu0 0
        %1253 = vmatpush1.bf16.msra.mxu0 0
        %1254 = vmatprep.subr.bf16.mxu0 0
        %1255 = vmatpush1.bf16.msra.mxu0 0
        %1256 = vmatprep.subr.bf16.mxu0 0
        %1257 = vmatpush1.bf16.msra.mxu0 0
        %1258 = vmatprep.subr.bf16.mxu0 0
        %1259 = vmatpush1.bf16.msra.mxu0 0
        %1260 = vmatprep.subr.bf16.mxu0 0
        %1261 = vmatpush1.bf16.msra.mxu0 0
        %1262 = vmatprep.subr.bf16.mxu0 0
        %1263 = vmatpush1.bf16.msra.mxu0 0
        %1264 = vmatprep.subr.bf16.mxu0 0
        %1265 = vmatpush1.bf16.msra.mxu0 %v1247
        %1266 = vmatprep.subr.bf16.mxu0 0
        %1267 = vmatpush1.bf16.msra.mxu0 %v1246
        %1268 = vmatprep.subr.bf16.mxu0 0
        %1269 = vmatpush2.bf16.msra.mxu0 0
        %1270 = vmatprep.subr.bf16.mxu0 0
        %1271 = vmatpush2.bf16.msra.mxu0 0
        %1272 = vmatprep.subr.bf16.mxu0 0
        %1273 = vmatpush2.bf16.msra.mxu0 0
        %1274 = vmatprep.subr.bf16.mxu0 0
        %1275 = vmatpush2.bf16.msra.mxu0 0
        %1276 = vmatprep.subr.bf16.mxu0 0
        %1277 = vmatpush2.bf16.msra.mxu0 0
        %1278 = vmatprep.subr.bf16.mxu0 0
        %1279 = vmatpush2.bf16.msra.mxu0 0
        %1280 = vmatprep.subr.bf16.mxu0 0
        %1281 = vmatpush2.bf16.msra.mxu0 0
        %1282 = vmatprep.subr.bf16.mxu0 0
        %1283 = vmatpush2.bf16.msra.mxu0 0
        %1284 = vmatprep.mubr.bf16.mxu0 0
        %1285 = vmatmul.mubr.bf16.gmra.mxu0 %v1250
        %v1286 = vpop.f32.mrf.mxu0
        %v1287 = vadd.f32 0.0, %v1286
        %v1288 = vpop.f32.mrf.mxu0
        %v1289 = vpop.f32.mrf.mxu0
        %v1290 = vpop.f32.mrf.mxu0
        %1291 = vdwg.mxu0
        %p1292 = scmp.eq.s32.totalorder %s40, 0
        // Predicated region
        $region93: #{tpu_custom_call.1} parent=63 // pred_check
          %p1293 = pneg %p1292
        $region94: #{tpu_custom_call.1} parent=63 // pred_check_branch
          %1295 = sbr.rel (%p1293) target = $region96
        $region95: #{tpu_custom_call.1} parent=63 // pred_region
          %1296 = vst.msk [vmem:[#allocation2] sm:$0xff] %vm584, 0.0
        $region96: #{tpu_custom_call.1} parent=63 // pred_fallthru
          _
        %v1297 = vld [vmem:[#allocation2] sm:$0xff]
        %v1298 = vadd.f32 %v1297, %v1287
        %1299 = vst.msk [vmem:[#allocation2] sm:$0xff] %vm584, %v1298
        // Predicated region
        $region97: #{tpu_custom_call.1} parent=63 // pred_check
          %p1300 = pneg %p1292
        $region98: #{tpu_custom_call.1} parent=63 // pred_check_branch
          %1302 = sbr.rel (%p1300) target = $region100
        $region99: #{tpu_custom_call.1} parent=63 // pred_region
          %v1303 = vld [vmem:[#allocation2] sm:$0xff]
          %v1304 = vld [vmem:[%s10] sm:$0x1]
          %v1306 = vlaneseq
          %v1307 = vshrl.u32 %v1306, 7
          %v1308 = vsub.s32 0, %v1307
          %v1309 = vrot.slane %v1304, %v1308
          %v1311 = vadd.f32 %v1303, %v1309
          %1312 = vst.msk [vmem:[%s554] sm:$0xff] %vm584, %v1311
        $region100: #{tpu_custom_call.1} parent=63 // pred_fallthru
          _
        %s1313 = sand.u32 %s310, 1
        %s1314 = scalar_lea.sflag [#allocation5], %s1313
        %s1315 = sand.u32 %s310, 1
        %s1316 = smul.addr %s1315, 8
        %s1317 = scalar_lea.vmem [#allocation15], %s1316
        // Predicated region
        $region101: #{tpu_custom_call.1} parent=63 // pred_check
          %p1318 = pneg %p320
        $region102: #{tpu_custom_call.1} parent=63 // pred_check_branch
          %1320 = sbr.rel (%p1318) target = $region104
        $region103: #{tpu_custom_call.1} parent=63 // pred_region
          %s1322 = ssub.s32 128, 128
          %1323 = vsyncadd %s1314, %s1322
          %s1324 = sadd.s32 %s39, %s38
          %s1325 = smul.addr %s1324, 128
          %s1326 = scalar_lea.hbm %s11, %s1325
          %s1328 = sshll.u32 %s1317, 4
          %s1329 = int_to_ptr.vmem [resolvable:$true] %s1328
          %1331 = dma.vmem_to_hbm [thread:$0]  %s1329, 128, %s1326, %s1314
        $region104: #{tpu_custom_call.1} parent=63 // pred_fallthru
          _
      $region64: #{tpu_custom_call.1} parent=5 // pred_fallthru
        _
      %p1332 = scmp.le.s32.totalorder 2, %s28
      // Predicated region
      $region105: #{tpu_custom_call.1} parent=5 // pred_check
        %p1333 = pneg %p1332
      $region106: #{tpu_custom_call.1} parent=5 // pred_check_branch
        %1335 = sbr.rel (%p1333) target = $region108
      $region107: #{tpu_custom_call.1} parent=5 // pred_region
        %s1336 = ssub.s32 %s28, 2
        // Predicated region
        $region109: #{tpu_custom_call.1} parent=107 // pred_check
          %p1337 = pneg %p326
        $region110: #{tpu_custom_call.1} parent=107 // pred_check_branch
          %1339 = sbr.rel (%p1337) target = $region112
        $region111: #{tpu_custom_call.1} parent=107 // pred_region
          %s1340 = sand.u32 %s311, 1
          %s1341 = scalar_lea.sflag [#allocation5], %s1340
          %s1342 = sand.u32 %s311, 1
          %s1343 = smul.addr %s1342, 8
          %s1344 = scalar_lea.vmem [#allocation15], %s1343
          %1345 = dma.done %s1341, 128
        $region112: #{tpu_custom_call.1} parent=107 // pred_fallthru
          _
      $region108: #{tpu_custom_call.1} parent=5 // pred_fallthru
        _
    $region6: #{tpu_custom_call.1} parent=1 // loop_footer
      %s32 = sadd.s32 1, %s28
    $region7: #{tpu_custom_call.1} parent=1 // loop_footer_branch
      %27 = sbr.rel target = $region3
    $region8: #{tpu_custom_call.1} parent=1 // loop_exit
      _
    %1346 = vsyncpa [#allocation4], 1
    %s1347 = scalar_lea.sflag [#allocation4], 1
    %1348 = vsyncpa %s1347, 1
    %1349 = vsyncpa [#allocation7], 1
    %s1350 = scalar_lea.sflag [#allocation7], 1
    %1351 = vsyncpa %s1350, 1
    %1352 = vsyncpa [#allocation10], 1
    %1353 = vsyncpa [#allocation13], 1
    %1354 = vsyncpa [#allocation5], 1
    %s1355 = scalar_lea.sflag [#allocation5], 1
    %1356 = vsyncpa %s1355, 1

</llo_original>
